<compile_context>
chip_gen: v7x
topology: tpu7x:2x2x1
jax: 0.10.0
libtpu: 0.0.40
codegen_flags: <defaults>
</compile_context>

<pallas_src>
import functools

import jax
import jax.numpy as jnp
from jax import lax
from jax.experimental import pallas as pl
from jax.experimental.pallas import tpu as pltpu

LN_EPS = 1e-6          # norm_layer = partial(nn.LayerNorm, eps=1e-06)
MLP_CHUNK = 1024       # cap on the (S, chunk) f32 GELU slab / per-step w1/w2 slice


# ---------------------------------------------------------------------------
# In-kernel math helpers (traced inside the Pallas kernels)
# ---------------------------------------------------------------------------
def _layer_norm(x, g, b):
    mu = jnp.mean(x, axis=-1, keepdims=True)
    var = jnp.mean((x - mu) ** 2, axis=-1, keepdims=True)
    return (x - mu) * lax.rsqrt(var + LN_EPS) * g + b


def _gelu_tanh(x):
    # tanh-approximate GELU; tanh lowers to the EUP (separate VLIW slot).
    # NOTE: differs from PyTorch's exact erf-based nn.GELU() by ~1e-3 (inference-OK).
    c = 0.7978845608028654  # sqrt(2/pi)
    return 0.5 * x * (1.0 + jnp.tanh(c * (x + 0.044715 * x * x * x)))


# ---------------------------------------------------------------------------
# Pallas kernels
# ---------------------------------------------------------------------------
def _encoder_block_kernel(*refs, num_heads, add_pos, final_ln, mlp_chunk):
    """torchvision EncoderBlock (eval mode, dropouts = identity):
         x  = LN1(in); x = MHSA(x); x = x + in
         y  = LN2(x);  y = MLP(y);  out = x + y
       Optionally fuses the pos-embedding add (first block) and the encoder's final
       LayerNorm (last block, emitted as a second output)."""
    i = 0
    x_ref = refs[i]; i += 1
    pos_ref = None
    if add_pos:
        pos_ref = refs[i]; i += 1
    (ln1_g, ln1_b, wqkv, bqkv, wo, bo,
     ln2_g, ln2_b, w1, b1, w2, b2) = refs[i:i + 12]
    i += 12
    if final_ln:
        lnf_g, lnf_b = refs[i], refs[i + 1]
        i += 2
    o_ref = refs[i]; i += 1
    oln_ref = refs[i] if final_ln else None

    x = x_ref[0].astype(jnp.float32)                         # (S, H)
    if add_pos:
        x = x + pos_ref[0].astype(jnp.float32)               # input + pos_embedding

    s_len, hidden = x.shape
    hd = hidden // num_heads
    scale = 1.0 / (hd ** 0.5)

    # ---- Multi-head self-attention (pre-LN); bf16 MXU matmuls, f32 accumulation ----
    h = _layer_norm(x, ln1_g[...], ln1_b[...]).astype(jnp.bfloat16)
    qkv = jnp.dot(h, wqkv[...], preferred_element_type=jnp.float32) + bqkv[...]
    qkv = qkv.astype(jnp.bfloat16)                            # cast q/k/v ONCE
    q = qkv[:, :hidden]
    k = qkv[:, hidden:2 * hidden]
    v = qkv[:, 2 * hidden:]

    # TODO(synk): for >=8 heads switch to lax.fori_loop (or a heads-batched einsum)
    # to bound vreg live ranges; at small head counts a static unroll is fine.
    heads = []
    for hh in range(num_heads):                               # static unroll over heads
        lo = hh * hd
        qh, kh, vh = q[:, lo:lo + hd], k[:, lo:lo + hd], v[:, lo:lo + hd]
        # scores = q @ k^T (contract last dims; MXU, f32 accumulate)
        s = lax.dot_general(qh, kh, (((1,), (1,)), ((), ())),
                            preferred_element_type=jnp.float32) * scale
        s = s - jnp.max(s, axis=-1, keepdims=True)
        p = jnp.exp(s)
        inv = pl.reciprocal(jnp.sum(p, axis=-1, keepdims=True), approx=True)   # EUP
        p = (p * inv).astype(jnp.bfloat16)                    # attention_dropout = id
        heads.append(jnp.dot(p, vh, preferred_element_type=jnp.float32)
                     .astype(jnp.bfloat16))                   # (S, hd)
    # One full-K output projection: concat(heads) @ wo, wo stored as (H, H).
    attn = jnp.dot(jnp.concatenate(heads, axis=-1), wo[...],
                   preferred_element_type=jnp.float32) + bo[...]
    x2 = x + attn                                             # residual (dropout = id)

    # ---- MLP (pre-LN), tiled over mlp_dim; bf16 matmuls / f32 accumulate ----------
    h2 = _layer_norm(x2, ln2_g[...], ln2_b[...]).astype(jnp.bfloat16)
    mlp_dim = w1.shape[1]
    n_chunks = (mlp_dim + mlp_chunk - 1) // mlp_chunk
    acc = jnp.zeros((s_len, hidden), jnp.float32)
    for c in range(n_chunks):                                 # static chunk loop
        lo = c * mlp_chunk
        hi = min(lo + mlp_chunk, mlp_dim)
        m = jnp.dot(h2, w1[:, lo:hi],
                    preferred_element_type=jnp.float32) + b1[:, lo:hi]
        m = _gelu_tanh(m).astype(jnp.bfloat16)                # GELU per chunk (EUP)
        acc = acc + jnp.dot(m, w2[lo:hi, :], preferred_element_type=jnp.float32)
    y = x2 + acc + b2[...]                                    # residual
    o_ref[0] = y.astype(o_ref.dtype)
    if final_ln:
        oln_ref[0] = _layer_norm(y, lnf_g[...], lnf_b[...]).astype(oln_ref.dtype)


def _pos_ln_kernel(x_ref, pos_ref, g_ref, b_ref, o_ref):
    # Degenerate num_layers == 0 path: out = LN(input + pos_embedding).
    x = x_ref[0].astype(jnp.float32) + pos_ref[0].astype(jnp.float32)
    o_ref[0] = _layer_norm(x, g_ref[...], b_ref[...]).astype(o_ref.dtype)


# ---------------------------------------------------------------------------
# Capability / hardware probes (narrow-purpose; never wrap the real kernel)
# ---------------------------------------------------------------------------
@functools.lru_cache(maxsize=None)
def _single_buffer_supported():
    """Detect pipeline_mode=pl.Buffered(1) support with a tiny probe kernel.
    Kept separate from the encoder kernel so this try/except can never mask a
    genuine tracing/compile error in the real kernel."""
    if not hasattr(pl, "Buffered"):
        return False

    def _probe(w_ref, o_ref):
        o_ref[...] = w_ref[...] + 1.0

    try:
        w = jnp.zeros((8, 128), jnp.float32)
        r = pl.pallas_call(
            _probe,
            out_shape=jax.ShapeDtypeStruct((8, 128), jnp.float32),
            grid=(1,),
            in_specs=[pl.BlockSpec((8, 128), lambda i: (0, 0),
                                   pipeline_mode=pl.Buffered(1))],
            out_specs=pl.BlockSpec((8, 128), lambda i: (0, 0)),
        )(w)
        jax.block_until_ready(r)
        return True
    except Exception:   # probe only decides weight buffering; real kernels run outside
        return False


@functools.lru_cache(maxsize=None)
def _vmem_limit_bytes():
    """Generation-aware VMEM budget: ~7/8 of physical capacity, capped at 100 MiB
    (v5e/v6e: ~100 MiB of 128; v7x: ~56 MiB of 64)."""
    try:
        cap = int(getattr(pltpu.get_tpu_info(), "vmem_capacity_bytes",
                          64 * 1024 * 1024))
    except Exception:   # non-TPU / interpret fallback — value is advisory there
        cap = 64 * 1024 * 1024
    return min(cap * 7 // 8, 100 * 1024 * 1024)


# ---------------------------------------------------------------------------
# BlockSpec helpers
# ---------------------------------------------------------------------------
def _act_spec(S, H):
    # One (1, S, H) slab per grid step; kernel indexes ref[0] to get (S, H).
    return pl.BlockSpec((1, S, H), lambda b: (b, 0, 0))


def _const_spec(shape, single_buffer):
    # Batch-invariant operand (weights / biases / pos): constant index_map across the
    # grid; request single buffering so it is not double-buffered in VMEM.
    nd = len(shape)
    idx = lambda b: (0,) * nd
    if single_buffer:
        return pl.BlockSpec(shape, idx, pipeline_mode=pl.Buffered(1))
    return pl.BlockSpec(shape, idx)


def _cost_estimate(batch, s, h, mlp_dim, num_heads, operands, n_out):
    flops = 2 * batch * s * h * (4 * h + 2 * s + 2 * mlp_dim)
    transcendentals = batch * (num_heads * s * s + s * mlp_dim)
    bytes_accessed = sum(int(a.size) * a.dtype.itemsize for a in operands)
    bytes_accessed += n_out * batch * s * h * 4
    return pl.CostEstimate(flops=flops, transcendentals=transcendentals,
                           bytes_accessed=bytes_accessed)


# ---------------------------------------------------------------------------
# pallas_call wrappers
# ---------------------------------------------------------------------------
def encoder_block(x, layer_params, num_heads, pos=None, final_ln=None):
    """One fused encoder block; optionally fuses pos-add (first) / final LN (last)."""
    B, S, H = x.shape
    add_pos = pos is not None
    do_final = final_ln is not None
    mlp_dim = layer_params[8].shape[1]          # w1: (H, mlp_dim)
    mlp_chunk = min(mlp_dim, MLP_CHUNK)

    kernel = functools.partial(_encoder_block_kernel, num_heads=num_heads,
                               add_pos=add_pos, final_ln=do_final,
                               mlp_chunk=mlp_chunk)

    inputs = [x]
    if add_pos:
        inputs.append(pos)
    inputs.extend(layer_params)
    if do_final:
        inputs.extend(final_ln)

    single = _single_buffer_supported()
    in_specs = [_act_spec(S, H)]
    in_specs.extend(_const_spec(a.shape, single) for a in inputs[1:])

    if do_final:
        out_shape = (jax.ShapeDtypeStruct((B, S, H), x.dtype),
                     jax.ShapeDtypeStruct((B, S, H), x.dtype))
        out_specs = (_act_spec(S, H), _act_spec(S, H))
        n_out = 2
    else:
        out_shape = jax.ShapeDtypeStruct((B, S, H), x.dtype)
        out_specs = _act_spec(S, H)
        n_out = 1

    return pl.pallas_call(
        kernel,
        out_shape=out_shape,
        grid=(B,),
        in_specs=in_specs,
        out_specs=out_specs,
        compiler_params=pltpu.CompilerParams(
            dimension_semantics=("parallel",),
            vmem_limit_bytes=_vmem_limit_bytes()),
        cost_estimate=_cost_estimate(B, S, H, mlp_dim, num_heads, inputs, n_out),
    )(*inputs)


def pos_and_final_ln(x, pos, g, b):
    B, S, H = x.shape
    return pl.pallas_call(
        _pos_ln_kernel,
        out_shape=jax.ShapeDtypeStruct((B, S, H), x.dtype),
        grid=(B,),
        in_specs=[_act_spec(S, H),
                  pl.BlockSpec((1, S, H), lambda bb: (0, 0, 0)),
                  pl.BlockSpec(g.shape, lambda bb: (0, 0)),
                  pl.BlockSpec(b.shape, lambda bb: (0, 0))],
        out_specs=_act_spec(S, H),
        compiler_params=pltpu.CompilerParams(
            dimension_semantics=("parallel",),
            vmem_limit_bytes=_vmem_limit_bytes()),
    )(x, pos, g, b)


def unetr_encoder_forward(x, params, num_heads):
    """Mirrors UnetREncoder.forward: returns (ln(tmp), intermediary_results)."""
    assert x.ndim == 3, "Expected (batch_size, seq_length, hidden_dim)"
    layers = params["layers"]
    n = len(layers)
    if n == 0:
        return pos_and_final_ln(x, params["pos"], params["ln_g"], params["ln_b"]), []

    intermediates = []
    tmp = x
    out = None
    for i, lp in enumerate(layers):
        pos = params["pos"] if i == 0 else None
        fin = (params["ln_g"], params["ln_b"]) if i == n - 1 else None
        res = encoder_block(tmp, lp, num_heads, pos=pos, final_ln=fin)
        if fin is not None:
            tmp, out = res
        else:
            tmp = res
        intermediates.append(tmp)
    return out, intermediates


# ---------------------------------------------------------------------------
# Deterministic parameter initialization (shapes from __init__; synthetic values).
# Matmul weights are stored in bf16 (f32-accumulated on the MXU); LN/bias params in f32.
# wqkv = [Wq^T | Wk^T | Wv^T] fused as (H, 3H); wo = out_proj.weight^T as (H, H).
# ---------------------------------------------------------------------------
def init_unetr_encoder_params(key, num_layers, num_heads, seq_length, hidden_dim,
                              mlp_dim):
    assert hidden_dim % num_heads == 0
    keys = jax.random.split(key, 1 + max(num_layers, 1))
    pos = 0.02 * jax.random.normal(keys[0], (1, seq_length, hidden_dim), jnp.float32)

    def nrm(k, shape, std=0.05):
        return std * jax.random.normal(k, shape, jnp.float32)

    layers = []
    for i in range(num_layers):
        lk = jax.random.split(keys[1 + i], 6)
        ln1_g = jnp.ones((1, hidden_dim), jnp.float32)
        ln1_b = jnp.zeros((1, hidden_dim), jnp.float32)
        wqkv = nrm(lk[0], (hidden_dim, 3 * hidden_dim)).astype(jnp.bfloat16)
        bqkv = nrm(lk[1], (1, 3 * hidden_dim), 0.01)
        wo = nrm(lk[2], (hidden_dim, hidden_dim)).astype(jnp.bfloat16)
        bo = jnp.zeros((1, hidden_dim), jnp.float32)
        ln2_g = jnp.ones((1, hidden_dim), jnp.float32)
        ln2_b = jnp.zeros((1, hidden_dim), jnp.float32)
        w1 = nrm(lk[3], (hidden_dim, mlp_dim)).astype(jnp.bfloat16)
        b1 = nrm(lk[4], (1, mlp_dim), 0.01)
        w2 = nrm(lk[5], (mlp_dim, hidden_dim)).astype(jnp.bfloat16)
        b2 = jnp.zeros((1, hidden_dim), jnp.float32)
        layers.append((ln1_g, ln1_b, wqkv, bqkv, wo, bo,
                       ln2_g, ln2_b, w1, b1, w2, b2))

    ln_g = jnp.ones((1, hidden_dim), jnp.float32)
    ln_b = jnp.zeros((1, hidden_dim), jnp.float32)
    return {"pos": pos, "layers": layers, "ln_g": ln_g, "ln_b": ln_b}


# ---------------------------------------------------------------------------
if __name__ == "__main__":
    # Small config consistent with UnetREncoder(seq_length, num_layers, num_heads,
    # hidden_dim, mlp_dim, dropout, attention_dropout); head_dim = 16.
    # TODO(synk): production ViT configs (H >= 128, head_dim >= 64, S >= 196) use the
    # MXU / lane-dense stores far better; these demo shapes are deliberately tiny.
    B, SEQ, NUM_LAYERS, NUM_HEADS, HIDDEN, MLP = 2, 8, 2, 4, 64, 128

    key = jax.random.PRNGKey(0)
    k_x, k_p = jax.random.split(key)
    x = jax.random.normal(k_x, (B, SEQ, HIDDEN), jnp.float32)
    params = init_unetr_encoder_params(k_p, NUM_LAYERS, NUM_HEADS, SEQ, HIDDEN, MLP)

    out, intermediates = unetr_encoder_forward(x, params, NUM_HEADS)
    jax.block_until_ready(out)
    for t in intermediates:
        jax.block_until_ready(t)

    assert out.shape == (B, SEQ, HIDDEN)
    assert len(intermediates) == NUM_LAYERS
    assert all(t.shape == (B, SEQ, HIDDEN) for t in intermediates)
    assert bool(jnp.isfinite(out).all())
    # TODO(synk): dropout / attention_dropout are identity (eval-mode); training-mode
    # RNG dropout is not implemented.
    print("KERNEL_OK")
</pallas_src>

<mosaic_0001>
module attributes {stable_mosaic.version = 11 : i64} {
  func.func @_probe(%arg0: i32, %arg1: memref<8x128xf32, #tpu.memory_space<vmem>>, %arg2: memref<8x128xf32, #tpu.memory_space<vmem>>) attributes {dimension_semantics = [#tpu.dimension_semantics<arbitrary>], iteration_bounds = array<i64: 1>, scalar_prefetch = 0 : i64, scratch_operands = 0 : i64, tpu.core_type = #tpu.core_type<tc>, window_params = [{pipeline_mode = #tpu.pipeline_mode<synchronous>, transform_indices = @transform_0, window_bounds = array<i64: 8, 128>}, {pipeline_mode = #tpu.pipeline_mode<synchronous>, transform_indices = @transform_1, window_bounds = array<i64: 8, 128>}]} {
    %c0 = arith.constant 0 : index
    %c0_0 = arith.constant 0 : index
    %0 = vector.load %arg1[%c0, %c0_0] : memref<8x128xf32, #tpu.memory_space<vmem>>, vector<8x128xf32>
    %cst = arith.constant 1.000000e+00 : f32
    %1 = vector.broadcast %cst : f32 to vector<8x128xf32>
    %2 = arith.addf %0, %1 : vector<8x128xf32>
    %c0_1 = arith.constant 0 : index
    %c0_2 = arith.constant 0 : index
    %3 = vector.load %arg2[%c0_1, %c0_2] : memref<8x128xf32, #tpu.memory_space<vmem>>, vector<8x128xf32>
    tpu.vector_store %arg2[%c0_1, %c0_2], %2 {strides = array<i32>} : memref<8x128xf32, #tpu.memory_space<vmem>>, vector<8x128xf32>,
    return
  }
  func.func @transform_0(%arg0: i32) -> (i32, i32) {
    %c0_i32 = arith.constant 0 : i32
    %c0_i32_0 = arith.constant 0 : i32
    %c0_i32_1 = arith.constant 0 : i32
    return %c0_i32, %c0_i32_0 : i32, i32
  }
  func.func @transform_1(%arg0: i32) -> (i32, i32) {
    %c0_i32 = arith.constant 0 : i32
    %c0_i32_0 = arith.constant 0 : i32
    %c0_i32_1 = arith.constant 0 : i32
    return %c0_i32, %c0_i32_0 : i32, i32
  }
}

module attributes {stable_mosaic.version = 11 : i64} {
  func.func @_encoder_block_kernel(%arg0: i32, %arg1: memref<1x8x64xf32, #tpu.memory_space<vmem>>, %arg2: memref<1x8x64xf32, #tpu.memory_space<vmem>>, %arg3: memref<1x64xf32, #tpu.memory_space<vmem>>, %arg4: memref<1x64xf32, #tpu.memory_space<vmem>>, %arg5: memref<64x192xbf16, #tpu.memory_space<vmem>>, %arg6: memref<1x192xf32, #tpu.memory_space<vmem>>, %arg7: memref<64x64xbf16, #tpu.memory_space<vmem>>, %arg8: memref<1x64xf32, #tpu.memory_space<vmem>>, %arg9: memref<1x64xf32, #tpu.memory_space<vmem>>, %arg10: memref<1x64xf32, #tpu.memory_space<vmem>>, %arg11: memref<64x128xbf16, #tpu.memory_space<vmem>>, %arg12: memref<1x128xf32, #tpu.memory_space<vmem>>, %arg13: memref<128x64xbf16, #tpu.memory_space<vmem>>, %arg14: memref<1x64xf32, #tpu.memory_space<vmem>>, %arg15: memref<1x8x64xf32, #tpu.memory_space<vmem>>) attributes {dimension_semantics = [#tpu.dimension_semantics<parallel>], iteration_bounds = array<i64: 2>, scalar_prefetch = 0 : i64, scratch_operands = 0 : i64, tpu.core_type = #tpu.core_type<tc>, window_params = [{transform_indices = @transform_0, window_bounds = array<i64: 1, 8, 64>}, {pipeline_mode = #tpu.pipeline_mode<synchronous>, transform_indices = @transform_1, window_bounds = array<i64: 1, 8, 64>}, {pipeline_mode = #tpu.pipeline_mode<synchronous>, transform_indices = @transform_2, window_bounds = array<i64: 1, 64>}, {pipeline_mode = #tpu.pipeline_mode<synchronous>, transform_indices = @transform_3, window_bounds = array<i64: 1, 64>}, {pipeline_mode = #tpu.pipeline_mode<synchronous>, transform_indices = @transform_4, window_bounds = array<i64: 64, 192>}, {pipeline_mode = #tpu.pipeline_mode<synchronous>, transform_indices = @transform_5, window_bounds = array<i64: 1, 192>}, {pipeline_mode = #tpu.pipeline_mode<synchronous>, transform_indices = @transform_6, window_bounds = array<i64: 64, 64>}, {pipeline_mode = #tpu.pipeline_mode<synchronous>, transform_indices = @transform_7, window_bounds = array<i64: 1, 64>}, {pipeline_mode = #tpu.pipeline_mode<synchronous>, transform_indices = @transform_8, window_bounds = array<i64: 1, 64>}, {pipeline_mode = #tpu.pipeline_mode<synchronous>, transform_indices = @transform_9, window_bounds = array<i64: 1, 64>}, {pipeline_mode = #tpu.pipeline_mode<synchronous>, transform_indices = @transform_10, window_bounds = array<i64: 64, 128>}, {pipeline_mode = #tpu.pipeline_mode<synchronous>, transform_indices = @transform_11, window_bounds = array<i64: 1, 128>}, {pipeline_mode = #tpu.pipeline_mode<synchronous>, transform_indices = @transform_12, window_bounds = array<i64: 128, 64>}, {pipeline_mode = #tpu.pipeline_mode<synchronous>, transform_indices = @transform_13, window_bounds = array<i64: 1, 64>}, {transform_indices = @transform_14, window_bounds = array<i64: 1, 8, 64>}]} {
    %c0 = arith.constant 0 : index
    %c0_0 = arith.constant 0 : index
    %c0_1 = arith.constant 0 : index
    %0 = vector.load %arg1[%c0, %c0_0, %c0_1] : memref<1x8x64xf32, #tpu.memory_space<vmem>>, vector<1x8x64xf32>
    %1 = vector.shape_cast %0 : vector<1x8x64xf32> to vector<8x64xf32>
    %c0_2 = arith.constant 0 : index
    %c0_3 = arith.constant 0 : index
    %c0_4 = arith.constant 0 : index
    %2 = vector.load %arg2[%c0_2, %c0_3, %c0_4] : memref<1x8x64xf32, #tpu.memory_space<vmem>>, vector<1x8x64xf32>
    %3 = vector.shape_cast %2 : vector<1x8x64xf32> to vector<8x64xf32>
    %4 = arith.addf %1, %3 : vector<8x64xf32>
    %c0_5 = arith.constant 0 : index
    %c0_6 = arith.constant 0 : index
    %5 = vector.load %arg3[%c0_5, %c0_6] : memref<1x64xf32, #tpu.memory_space<vmem>>, vector<1x64xf32>
    %c0_7 = arith.constant 0 : index
    %c0_8 = arith.constant 0 : index
    %6 = vector.load %arg4[%c0_7, %c0_8] : memref<1x64xf32, #tpu.memory_space<vmem>>, vector<1x64xf32>
    %cst = arith.constant dense<0.000000e+00> : vector<8xf32>
    %7 = vector.multi_reduction <add>, %4, %cst [1] : vector<8x64xf32> to vector<8xf32>
    %8 = vector.shape_cast %7 : vector<8xf32> to vector<8x1xf32>
    %cst_9 = arith.constant 6.400000e+01 : f32
    %9 = vector.broadcast %cst_9 : f32 to vector<8x1xf32>
    %10 = arith.divf %8, %9 : vector<8x1xf32>
    %11 = vector.broadcast %10 : vector<8x1xf32> to vector<8x64xf32>
    %12 = arith.subf %4, %11 : vector<8x64xf32>
    %13 = arith.mulf %12, %12 : vector<8x64xf32>
    %cst_10 = arith.constant dense<0.000000e+00> : vector<8xf32>
    %14 = vector.multi_reduction <add>, %13, %cst_10 [1] : vector<8x64xf32> to vector<8xf32>
    %15 = vector.shape_cast %14 : vector<8xf32> to vector<8x1xf32>
    %cst_11 = arith.constant 6.400000e+01 : f32
    %16 = vector.broadcast %cst_11 : f32 to vector<8x1xf32>
    %17 = arith.divf %15, %16 : vector<8x1xf32>
    %18 = vector.broadcast %10 : vector<8x1xf32> to vector<8x64xf32>
    %19 = arith.subf %4, %18 : vector<8x64xf32>
    %cst_12 = arith.constant 9.99999997E-7 : f32
    %20 = vector.broadcast %cst_12 : f32 to vector<8x1xf32>
    %21 = arith.addf %17, %20 : vector<8x1xf32>
    %22 = math.rsqrt %21 : vector<8x1xf32>
    %23 = vector.broadcast %22 : vector<8x1xf32> to vector<8x64xf32>
    %24 = arith.mulf %19, %23 : vector<8x64xf32>
    %25 = vector.broadcast %5 : vector<1x64xf32> to vector<8x64xf32>
    %26 = arith.mulf %24, %25 : vector<8x64xf32>
    %27 = vector.broadcast %6 : vector<1x64xf32> to vector<8x64xf32>
    %28 = arith.addf %26, %27 : vector<8x64xf32>
    %29 = arith.truncf %28 : vector<8x64xf32> to vector<8x64xbf16>
    %c0_13 = arith.constant 0 : index
    %c0_14 = arith.constant 0 : index
    %30 = vector.load %arg5[%c0_13, %c0_14] : memref<64x192xbf16, #tpu.memory_space<vmem>>, vector<64x192xbf16>
    %cst_15 = arith.constant dense<0.000000e+00> : vector<8x192xf32>
    %31 = tpu.matmul %29, %30, %cst_15 {dimension_numbers = #tpu.dot_dimension_numbers<[1], [0], [0], [1], [0, 0, 1, 1], [], []>} : vector<8x64xbf16>, vector<64x192xbf16>, vector<8x192xf32> -> vector<8x192xf32>
    %c0_16 = arith.constant 0 : index
    %c0_17 = arith.constant 0 : index
    %32 = vector.load %arg6[%c0_16, %c0_17] : memref<1x192xf32, #tpu.memory_space<vmem>>, vector<1x192xf32>
    %33 = vector.broadcast %32 : vector<1x192xf32> to vector<8x192xf32>
    %34 = arith.addf %31, %33 : vector<8x192xf32>
    %35 = arith.truncf %34 : vector<8x192xf32> to vector<8x192xbf16>
    %36 = vector.extract_strided_slice %35 {offsets = [0, 0], sizes = [8, 64], strides = [1, 1]} : vector<8x192xbf16> to vector<8x64xbf16>
    %37 = vector.extract_strided_slice %35 {offsets = [0, 64], sizes = [8, 64], strides = [1, 1]} : vector<8x192xbf16> to vector<8x64xbf16>
    %38 = vector.extract_strided_slice %35 {offsets = [0, 128], sizes = [8, 64], strides = [1, 1]} : vector<8x192xbf16> to vector<8x64xbf16>
    %39 = vector.extract_strided_slice %36 {offsets = [0, 0], sizes = [8, 16], strides = [1, 1]} : vector<8x64xbf16> to vector<8x16xbf16>
    %40 = vector.extract_strided_slice %37 {offsets = [0, 0], sizes = [8, 16], strides = [1, 1]} : vector<8x64xbf16> to vector<8x16xbf16>
    %41 = vector.extract_strided_slice %38 {offsets = [0, 0], sizes = [8, 16], strides = [1, 1]} : vector<8x64xbf16> to vector<8x16xbf16>
    %cst_18 = arith.constant dense<0.000000e+00> : vector<8x8xf32>
    %42 = tpu.matmul %39, %40, %cst_18 {dimension_numbers = #tpu.dot_dimension_numbers<[1], [1], [0], [0], [0, 0, 1, 0], [], []>} : vector<8x16xbf16>, vector<8x16xbf16>, vector<8x8xf32> -> vector<8x8xf32>
    %cst_19 = arith.constant 2.500000e-01 : f32
    %43 = vector.broadcast %cst_19 : f32 to vector<8x8xf32>
    %44 = arith.mulf %42, %43 : vector<8x8xf32>
    %cst_20 = arith.constant dense<0xFF800000> : vector<8xf32>
    %45 = vector.multi_reduction <maximumf>, %44, %cst_20 [1] : vector<8x8xf32> to vector<8xf32>
    %46 = vector.shape_cast %45 : vector<8xf32> to vector<8x1xf32>
    %47 = vector.broadcast %46 : vector<8x1xf32> to vector<8x8xf32>
    %48 = arith.subf %44, %47 : vector<8x8xf32>
    %49 = math.exp %48 : vector<8x8xf32>
    %cst_21 = arith.constant dense<0.000000e+00> : vector<8xf32>
    %50 = vector.multi_reduction <add>, %49, %cst_21 [1] : vector<8x8xf32> to vector<8xf32>
    %51 = vector.shape_cast %50 : vector<8xf32> to vector<8x1xf32>
    %52 = tpu.reciprocal %51 {approx = true} : vector<8x1xf32> -> vector<8x1xf32>
    %53 = vector.broadcast %52 : vector<8x1xf32> to vector<8x8xf32>
    %54 = arith.mulf %49, %53 : vector<8x8xf32>
    %55 = arith.truncf %54 : vector<8x8xf32> to vector<8x8xbf16>
    %cst_22 = arith.constant dense<0.000000e+00> : vector<8x16xf32>
    %56 = tpu.matmul %55, %41, %cst_22 {dimension_numbers = #tpu.dot_dimension_numbers<[1], [0], [0], [1], [0, 0, 1, 1], [], []>} : vector<8x8xbf16>, vector<8x16xbf16>, vector<8x16xf32> -> vector<8x16xf32>
    %57 = arith.truncf %56 : vector<8x16xf32> to vector<8x16xbf16>
    %58 = vector.extract_strided_slice %36 {offsets = [0, 16], sizes = [8, 16], strides = [1, 1]} : vector<8x64xbf16> to vector<8x16xbf16>
    %59 = vector.extract_strided_slice %37 {offsets = [0, 16], sizes = [8, 16], strides = [1, 1]} : vector<8x64xbf16> to vector<8x16xbf16>
    %60 = vector.extract_strided_slice %38 {offsets = [0, 16], sizes = [8, 16], strides = [1, 1]} : vector<8x64xbf16> to vector<8x16xbf16>
    %cst_23 = arith.constant dense<0.000000e+00> : vector<8x8xf32>
    %61 = tpu.matmul %58, %59, %cst_23 {dimension_numbers = #tpu.dot_dimension_numbers<[1], [1], [0], [0], [0, 0, 1, 0], [], []>} : vector<8x16xbf16>, vector<8x16xbf16>, vector<8x8xf32> -> vector<8x8xf32>
    %cst_24 = arith.constant 2.500000e-01 : f32
    %62 = vector.broadcast %cst_24 : f32 to vector<8x8xf32>
    %63 = arith.mulf %61, %62 : vector<8x8xf32>
    %cst_25 = arith.constant dense<0xFF800000> : vector<8xf32>
    %64 = vector.multi_reduction <maximumf>, %63, %cst_25 [1] : vector<8x8xf32> to vector<8xf32>
    %65 = vector.shape_cast %64 : vector<8xf32> to vector<8x1xf32>
    %66 = vector.broadcast %65 : vector<8x1xf32> to vector<8x8xf32>
    %67 = arith.subf %63, %66 : vector<8x8xf32>
    %68 = math.exp %67 : vector<8x8xf32>
    %cst_26 = arith.constant dense<0.000000e+00> : vector<8xf32>
    %69 = vector.multi_reduction <add>, %68, %cst_26 [1] : vector<8x8xf32> to vector<8xf32>
    %70 = vector.shape_cast %69 : vector<8xf32> to vector<8x1xf32>
    %71 = tpu.reciprocal %70 {approx = true} : vector<8x1xf32> -> vector<8x1xf32>
    %72 = vector.broadcast %71 : vector<8x1xf32> to vector<8x8xf32>
    %73 = arith.mulf %68, %72 : vector<8x8xf32>
    %74 = arith.truncf %73 : vector<8x8xf32> to vector<8x8xbf16>
    %cst_27 = arith.constant dense<0.000000e+00> : vector<8x16xf32>
    %75 = tpu.matmul %74, %60, %cst_27 {dimension_numbers = #tpu.dot_dimension_numbers<[1], [0], [0], [1], [0, 0, 1, 1], [], []>} : vector<8x8xbf16>, vector<8x16xbf16>, vector<8x16xf32> -> vector<8x16xf32>
    %76 = arith.truncf %75 : vector<8x16xf32> to vector<8x16xbf16>
    %77 = vector.extract_strided_slice %36 {offsets = [0, 32], sizes = [8, 16], strides = [1, 1]} : vector<8x64xbf16> to vector<8x16xbf16>
    %78 = vector.extract_strided_slice %37 {offsets = [0, 32], sizes = [8, 16], strides = [1, 1]} : vector<8x64xbf16> to vector<8x16xbf16>
    %79 = vector.extract_strided_slice %38 {offsets = [0, 32], sizes = [8, 16], strides = [1, 1]} : vector<8x64xbf16> to vector<8x16xbf16>
    %cst_28 = arith.constant dense<0.000000e+00> : vector<8x8xf32>
    %80 = tpu.matmul %77, %78, %cst_28 {dimension_numbers = #tpu.dot_dimension_numbers<[1], [1], [0], [0], [0, 0, 1, 0], [], []>} : vector<8x16xbf16>, vector<8x16xbf16>, vector<8x8xf32> -> vector<8x8xf32>
    %cst_29 = arith.constant 2.500000e-01 : f32
    %81 = vector.broadcast %cst_29 : f32 to vector<8x8xf32>
    %82 = arith.mulf %80, %81 : vector<8x8xf32>
    %cst_30 = arith.constant dense<0xFF800000> : vector<8xf32>
    %83 = vector.multi_reduction <maximumf>, %82, %cst_30 [1] : vector<8x8xf32> to vector<8xf32>
    %84 = vector.shape_cast %83 : vector<8xf32> to vector<8x1xf32>
    %85 = vector.broadcast %84 : vector<8x1xf32> to vector<8x8xf32>
    %86 = arith.subf %82, %85 : vector<8x8xf32>
    %87 = math.exp %86 : vector<8x8xf32>
    %cst_31 = arith.constant dense<0.000000e+00> : vector<8xf32>
    %88 = vector.multi_reduction <add>, %87, %cst_31 [1] : vector<8x8xf32> to vector<8xf32>
    %89 = vector.shape_cast %88 : vector<8xf32> to vector<8x1xf32>
    %90 = tpu.reciprocal %89 {approx = true} : vector<8x1xf32> -> vector<8x1xf32>
    %91 = vector.broadcast %90 : vector<8x1xf32> to vector<8x8xf32>
    %92 = arith.mulf %87, %91 : vector<8x8xf32>
    %93 = arith.truncf %92 : vector<8x8xf32> to vector<8x8xbf16>
    %cst_32 = arith.constant dense<0.000000e+00> : vector<8x16xf32>
    %94 = tpu.matmul %93, %79, %cst_32 {dimension_numbers = #tpu.dot_dimension_numbers<[1], [0], [0], [1], [0, 0, 1, 1], [], []>} : vector<8x8xbf16>, vector<8x16xbf16>, vector<8x16xf32> -> vector<8x16xf32>
    %95 = arith.truncf %94 : vector<8x16xf32> to vector<8x16xbf16>
    %96 = vector.extract_strided_slice %36 {offsets = [0, 48], sizes = [8, 16], strides = [1, 1]} : vector<8x64xbf16> to vector<8x16xbf16>
    %97 = vector.extract_strided_slice %37 {offsets = [0, 48], sizes = [8, 16], strides = [1, 1]} : vector<8x64xbf16> to vector<8x16xbf16>
    %98 = vector.extract_strided_slice %38 {offsets = [0, 48], sizes = [8, 16], strides = [1, 1]} : vector<8x64xbf16> to vector<8x16xbf16>
    %cst_33 = arith.constant dense<0.000000e+00> : vector<8x8xf32>
    %99 = tpu.matmul %96, %97, %cst_33 {dimension_numbers = #tpu.dot_dimension_numbers<[1], [1], [0], [0], [0, 0, 1, 0], [], []>} : vector<8x16xbf16>, vector<8x16xbf16>, vector<8x8xf32> -> vector<8x8xf32>
    %cst_34 = arith.constant 2.500000e-01 : f32
    %100 = vector.broadcast %cst_34 : f32 to vector<8x8xf32>
    %101 = arith.mulf %99, %100 : vector<8x8xf32>
    %cst_35 = arith.constant dense<0xFF800000> : vector<8xf32>
    %102 = vector.multi_reduction <maximumf>, %101, %cst_35 [1] : vector<8x8xf32> to vector<8xf32>
    %103 = vector.shape_cast %102 : vector<8xf32> to vector<8x1xf32>
    %104 = vector.broadcast %103 : vector<8x1xf32> to vector<8x8xf32>
    %105 = arith.subf %101, %104 : vector<8x8xf32>
    %106 = math.exp %105 : vector<8x8xf32>
    %cst_36 = arith.constant dense<0.000000e+00> : vector<8xf32>
    %107 = vector.multi_reduction <add>, %106, %cst_36 [1] : vector<8x8xf32> to vector<8xf32>
    %108 = vector.shape_cast %107 : vector<8xf32> to vector<8x1xf32>
    %109 = tpu.reciprocal %108 {approx = true} : vector<8x1xf32> -> vector<8x1xf32>
    %110 = vector.broadcast %109 : vector<8x1xf32> to vector<8x8xf32>
    %111 = arith.mulf %106, %110 : vector<8x8xf32>
    %112 = arith.truncf %111 : vector<8x8xf32> to vector<8x8xbf16>
    %cst_37 = arith.constant dense<0.000000e+00> : vector<8x16xf32>
    %113 = tpu.matmul %112, %98, %cst_37 {dimension_numbers = #tpu.dot_dimension_numbers<[1], [0], [0], [1], [0, 0, 1, 1], [], []>} : vector<8x8xbf16>, vector<8x16xbf16>, vector<8x16xf32> -> vector<8x16xf32>
    %114 = arith.truncf %113 : vector<8x16xf32> to vector<8x16xbf16>
    %115 = tpu.concatenate %57, %76, %95, %114 in 1 : vector<8x16xbf16>, vector<8x16xbf16>, vector<8x16xbf16>, vector<8x16xbf16> -> vector<8x64xbf16>
    %c0_38 = arith.constant 0 : index
    %c0_39 = arith.constant 0 : index
    %116 = vector.load %arg7[%c0_38, %c0_39] : memref<64x64xbf16, #tpu.memory_space<vmem>>, vector<64x64xbf16>
    %cst_40 = arith.constant dense<0.000000e+00> : vector<8x64xf32>
    %117 = tpu.matmul %115, %116, %cst_40 {dimension_numbers = #tpu.dot_dimension_numbers<[1], [0], [0], [1], [0, 0, 1, 1], [], []>} : vector<8x64xbf16>, vector<64x64xbf16>, vector<8x64xf32> -> vector<8x64xf32>
    %c0_41 = arith.constant 0 : index
    %c0_42 = arith.constant 0 : index
    %118 = vector.load %arg8[%c0_41, %c0_42] : memref<1x64xf32, #tpu.memory_space<vmem>>, vector<1x64xf32>
    %119 = vector.broadcast %118 : vector<1x64xf32> to vector<8x64xf32>
    %120 = arith.addf %117, %119 : vector<8x64xf32>
    %121 = arith.addf %4, %120 : vector<8x64xf32>
    %c0_43 = arith.constant 0 : index
    %c0_44 = arith.constant 0 : index
    %122 = vector.load %arg9[%c0_43, %c0_44] : memref<1x64xf32, #tpu.memory_space<vmem>>, vector<1x64xf32>
    %c0_45 = arith.constant 0 : index
    %c0_46 = arith.constant 0 : index
    %123 = vector.load %arg10[%c0_45, %c0_46] : memref<1x64xf32, #tpu.memory_space<vmem>>, vector<1x64xf32>
    %cst_47 = arith.constant dense<0.000000e+00> : vector<8xf32>
    %124 = vector.multi_reduction <add>, %121, %cst_47 [1] : vector<8x64xf32> to vector<8xf32>
    %125 = vector.shape_cast %124 : vector<8xf32> to vector<8x1xf32>
    %cst_48 = arith.constant 6.400000e+01 : f32
    %126 = vector.broadcast %cst_48 : f32 to vector<8x1xf32>
    %127 = arith.divf %125, %126 : vector<8x1xf32>
    %128 = vector.broadcast %127 : vector<8x1xf32> to vector<8x64xf32>
    %129 = arith.subf %121, %128 : vector<8x64xf32>
    %130 = arith.mulf %129, %129 : vector<8x64xf32>
    %cst_49 = arith.constant dense<0.000000e+00> : vector<8xf32>
    %131 = vector.multi_reduction <add>, %130, %cst_49 [1] : vector<8x64xf32> to vector<8xf32>
    %132 = vector.shape_cast %131 : vector<8xf32> to vector<8x1xf32>
    %cst_50 = arith.constant 6.400000e+01 : f32
    %133 = vector.broadcast %cst_50 : f32 to vector<8x1xf32>
    %134 = arith.divf %132, %133 : vector<8x1xf32>
    %135 = vector.broadcast %127 : vector<8x1xf32> to vector<8x64xf32>
    %136 = arith.subf %121, %135 : vector<8x64xf32>
    %cst_51 = arith.constant 9.99999997E-7 : f32
    %137 = vector.broadcast %cst_51 : f32 to vector<8x1xf32>
    %138 = arith.addf %134, %137 : vector<8x1xf32>
    %139 = math.rsqrt %138 : vector<8x1xf32>
    %140 = vector.broadcast %139 : vector<8x1xf32> to vector<8x64xf32>
    %141 = arith.mulf %136, %140 : vector<8x64xf32>
    %142 = vector.broadcast %122 : vector<1x64xf32> to vector<8x64xf32>
    %143 = arith.mulf %141, %142 : vector<8x64xf32>
    %144 = vector.broadcast %123 : vector<1x64xf32> to vector<8x64xf32>
    %145 = arith.addf %143, %144 : vector<8x64xf32>
    %146 = arith.truncf %145 : vector<8x64xf32> to vector<8x64xbf16>
    %cst_52 = arith.constant 0.000000e+00 : f32
    %147 = vector.broadcast %cst_52 : f32 to vector<8x64xf32>
    %c0_53 = arith.constant 0 : index
    %c0_54 = arith.constant 0 : index
    %148 = vector.load %arg11[%c0_53, %c0_54] : memref<64x128xbf16, #tpu.memory_space<vmem>>, vector<64x128xbf16>
    %cst_55 = arith.constant dense<0.000000e+00> : vector<8x128xf32>
    %149 = tpu.matmul %146, %148, %cst_55 {dimension_numbers = #tpu.dot_dimension_numbers<[1], [0], [0], [1], [0, 0, 1, 1], [], []>} : vector<8x64xbf16>, vector<64x128xbf16>, vector<8x128xf32> -> vector<8x128xf32>
    %c0_56 = arith.constant 0 : index
    %c0_57 = arith.constant 0 : index
    %150 = vector.load %arg12[%c0_56, %c0_57] : memref<1x128xf32, #tpu.memory_space<vmem>>, vector<1x128xf32>
    %151 = vector.broadcast %150 : vector<1x128xf32> to vector<8x128xf32>
    %152 = arith.addf %149, %151 : vector<8x128xf32>
    %cst_58 = arith.constant 5.000000e-01 : f32
    %153 = vector.broadcast %cst_58 : f32 to vector<8x128xf32>
    %154 = arith.mulf %153, %152 : vector<8x128xf32>
    %cst_59 = arith.constant 4.471500e-02 : f32
    %155 = vector.broadcast %cst_59 : f32 to vector<8x128xf32>
    %156 = arith.mulf %155, %152 : vector<8x128xf32>
    %157 = arith.mulf %156, %152 : vector<8x128xf32>
    %158 = arith.mulf %157, %152 : vector<8x128xf32>
    %159 = arith.addf %152, %158 : vector<8x128xf32>
    %cst_60 = arith.constant 0.797884583 : f32
    %160 = vector.broadcast %cst_60 : f32 to vector<8x128xf32>
    %161 = arith.mulf %160, %159 : vector<8x128xf32>
    %162 = math.tanh %161 : vector<8x128xf32>
    %cst_61 = arith.constant 1.000000e+00 : f32
    %163 = vector.broadcast %cst_61 : f32 to vector<8x128xf32>
    %164 = arith.addf %163, %162 : vector<8x128xf32>
    %165 = arith.mulf %154, %164 : vector<8x128xf32>
    %166 = arith.truncf %165 : vector<8x128xf32> to vector<8x128xbf16>
    %c0_62 = arith.constant 0 : index
    %c0_63 = arith.constant 0 : index
    %167 = vector.load %arg13[%c0_62, %c0_63] : memref<128x64xbf16, #tpu.memory_space<vmem>>, vector<128x64xbf16>
    %cst_64 = arith.constant dense<0.000000e+00> : vector<8x64xf32>
    %168 = tpu.matmul %166, %167, %cst_64 {dimension_numbers = #tpu.dot_dimension_numbers<[1], [0], [0], [1], [0, 0, 1, 1], [], []>} : vector<8x128xbf16>, vector<128x64xbf16>, vector<8x64xf32> -> vector<8x64xf32>
    %169 = arith.addf %147, %168 : vector<8x64xf32>
    %170 = arith.addf %121, %169 : vector<8x64xf32>
    %c0_65 = arith.constant 0 : index
    %c0_66 = arith.constant 0 : index
    %171 = vector.load %arg14[%c0_65, %c0_66] : memref<1x64xf32, #tpu.memory_space<vmem>>, vector<1x64xf32>
    %172 = vector.broadcast %171 : vector<1x64xf32> to vector<8x64xf32>
    %173 = arith.addf %170, %172 : vector<8x64xf32>
    %c0_67 = arith.constant 0 : index
    %c0_68 = arith.constant 0 : index
    %c0_69 = arith.constant 0 : index
    %174 = vector.load %arg15[%c0_67, %c0_68, %c0_69] : memref<1x8x64xf32, #tpu.memory_space<vmem>>, vector<1x8x64xf32>
    %175 = vector.shape_cast %174 : vector<1x8x64xf32> to vector<8x64xf32>
    %176 = vector.shape_cast %173 : vector<8x64xf32> to vector<1x8x64xf32>
    tpu.vector_store %arg15[%c0_67, %c0_68, %c0_69], %176 {strides = array<i32>} : memref<1x8x64xf32, #tpu.memory_space<vmem>>, vector<1x8x64xf32>,
    return
  }
  func.func @transform_0(%arg0: i32) -> (i32, i32, i32) {
    %c0_i32 = arith.constant 0 : i32
    %c0_i32_0 = arith.constant 0 : i32
    %c0_i32_1 = arith.constant 0 : i32
    return %arg0, %c0_i32, %c0_i32_0 : i32, i32, i32
  }
  func.func @transform_1(%arg0: i32) -> (i32, i32, i32) {
    %c0_i32 = arith.constant 0 : i32
    %c0_i32_0 = arith.constant 0 : i32
    %c0_i32_1 = arith.constant 0 : i32
    %c0_i32_2 = arith.constant 0 : i32
    return %c0_i32, %c0_i32_0, %c0_i32_1 : i32, i32, i32
  }
  func.func @transform_2(%arg0: i32) -> (i32, i32) {
    %c0_i32 = arith.constant 0 : i32
    %c0_i32_0 = arith.constant 0 : i32
    %c0_i32_1 = arith.constant 0 : i32
    return %c0_i32, %c0_i32_0 : i32, i32
  }
  func.func @transform_3(%arg0: i32) -> (i32, i32) {
    %c0_i32 = arith.constant 0 : i32
    %c0_i32_0 = arith.constant 0 : i32
    %c0_i32_1 = arith.constant 0 : i32
    return %c0_i32, %c0_i32_0 : i32, i32
  }
  func.func @transform_4(%arg0: i32) -> (i32, i32) {
    %c0_i32 = arith.constant 0 : i32
    %c0_i32_0 = arith.constant 0 : i32
    %c0_i32_1 = arith.constant 0 : i32
    return %c0_i32, %c0_i32_0 : i32, i32
  }
  func.func @transform_5(%arg0: i32) -> (i32, i32) {
    %c0_i32 = arith.constant 0 : i32
    %c0_i32_0 = arith.constant 0 : i32
    %c0_i32_1 = arith.constant 0 : i32
    return %c0_i32, %c0_i32_0 : i32, i32
  }
  func.func @transform_6(%arg0: i32) -> (i32, i32) {
    %c0_i32 = arith.constant 0 : i32
    %c0_i32_0 = arith.constant 0 : i32
    %c0_i32_1 = arith.constant 0 : i32
    return %c0_i32, %c0_i32_0 : i32, i32
  }
  func.func @transform_7(%arg0: i32) -> (i32, i32) {
    %c0_i32 = arith.constant 0 : i32
    %c0_i32_0 = arith.constant 0 : i32
    %c0_i32_1 = arith.constant 0 : i32
    return %c0_i32, %c0_i32_0 : i32, i32
  }
  func.func @transform_8(%arg0: i32) -> (i32, i32) {
    %c0_i32 = arith.constant 0 : i32
    %c0_i32_0 = arith.constant 0 : i32
    %c0_i32_1 = arith.constant 0 : i32
    return %c0_i32, %c0_i32_0 : i32, i32
  }
  func.func @transform_9(%arg0: i32) -> (i32, i32) {
    %c0_i32 = arith.constant 0 : i32
    %c0_i32_0 = arith.constant 0 : i32
    %c0_i32_1 = arith.constant 0 : i32
    return %c0_i32, %c0_i32_0 : i32, i32
  }
  func.func @transform_10(%arg0: i32) -> (i32, i32) {
    %c0_i32 = arith.constant 0 : i32
    %c0_i32_0 = arith.constant 0 : i32
    %c0_i32_1 = arith.constant 0 : i32
    return %c0_i32, %c0_i32_0 : i32, i32
  }
  func.func @transform_11(%arg0: i32) -> (i32, i32) {
    %c0_i32 = arith.constant 0 : i32
    %c0_i32_0 = arith.constant 0 : i32
    %c0_i32_1 = arith.constant 0 : i32
    return %c0_i32, %c0_i32_0 : i32, i32
  }
  func.func @transform_12(%arg0: i32) -> (i32, i32) {
    %c0_i32 = arith.constant 0 : i32
    %c0_i32_0 = arith.constant 0 : i32
    %c0_i32_1 = arith.constant 0 : i32
    return %c0_i32, %c0_i32_0 : i32, i32
  }
  func.func @transform_13(%arg0: i32) -> (i32, i32) {
    %c0_i32 = arith.constant 0 : i32
    %c0_i32_0 = arith.constant 0 : i32
    %c0_i32_1 = arith.constant 0 : i32
    return %c0_i32, %c0_i32_0 : i32, i32
  }
  func.func @transform_14(%arg0: i32) -> (i32, i32, i32) {
    %c0_i32 = arith.constant 0 : i32
    %c0_i32_0 = arith.constant 0 : i32
    %c0_i32_1 = arith.constant 0 : i32
    return %arg0, %c0_i32, %c0_i32_0 : i32, i32, i32
  }
}

</mosaic_0001>

<llo_original>
// kernel: tpu_custom_call.1
$region0: #{tpu_custom_call.1}
  #allocation0 [shape = 'u32[]', space=smem, size = 0x4, offset = 0x4, fixed_abs, tag = 'smem constant byte address 0x4 - core index']
  #allocation1 [shape = 'u32[144,128]{1,0:T(1,128)}', space=vmem, size = 0x12000, scoped, tag = 'internal scratch']
  %s0 = inlined_call_operand.hbm [shape: f32[8,128], index: 0, kind: input, shape index: {}]
  %s1 = inlined_call_operand.hbm [shape: f32[8,128], index: 1, kind: output, shape index: {}]
  %s2 = sld [smem:[#allocation0]]
  $region18: #{tpu_custom_call.1} parent=0
    _
  %s4 = ssub.s32 1, %s2
  %s5 = scalar_select 0, %s4, %s2
  $region1: #{tpu_custom_call.1} parent=0
    #allocation2 [shape = 'u8[4096]{0}', space=vmem, size = 0x1000, scoped, tag = 'input window, operand 0, single buffered']
    #allocation3 [shape = 's32[1]{0}', space=sflag, size = 0x4, scoped, tag = 'scoped memory for tpu_custom_call.1']
    #allocation4 [shape = 's32[1]{0}', space=sflag, size = 0x4, scoped, tag = 'scoped memory for tpu_custom_call.1']
    #allocation5 [shape = 'u8[4096]{0}', space=vmem, size = 0x1000, scoped, tag = 'output window, operand 0, single buffered']
    %6 = vsyncpa [#allocation3], 0
    %7 = vsyncpa [#allocation4], 0
    // Predicated region
    $region2: #{tpu_custom_call.1} parent=1 // pred_check
      _
    $region3: #{tpu_custom_call.1} parent=1 // pred_check_branch
      %9 = sbr.rel (0) target = $region5
    $region4: #{tpu_custom_call.1} parent=1 // pred_region
      %s11 = ssub.s32 128, 128
      %12 = vsyncadd [#allocation3], %s11
      %s14 = sshll.u32 [#allocation2], 4
      %s15 = int_to_ptr.vmem [resolvable:$true] %s14
      %17 = dma.hbm_to_vmem [thread:$0]  %s0, 128, %s15, [#allocation3]
    $region5: #{tpu_custom_call.1} parent=1 // pred_fallthru
      _
    // Predicated region
    $region6: #{tpu_custom_call.1} parent=1 // pred_check
      _
    $region7: #{tpu_custom_call.1} parent=1 // pred_check_branch
      %19 = sbr.rel (0) target = $region9
    $region8: #{tpu_custom_call.1} parent=1 // pred_region
      %20 = dma.done [#allocation3], 128
    $region9: #{tpu_custom_call.1} parent=1 // pred_fallthru
      _
    %v21 = vld [vmem:[#allocation2] sm:$0xff]
    %v22 = vadd.f32 %v21, 1.0
    %23 = vst [vmem:[#allocation5] sm:$0xff] %v22
    // Predicated region
    $region10: #{tpu_custom_call.1} parent=1 // pred_check
      _
    $region11: #{tpu_custom_call.1} parent=1 // pred_check_branch
      %25 = sbr.rel (0) target = $region13
    $region12: #{tpu_custom_call.1} parent=1 // pred_region
      %s27 = ssub.s32 128, 128
      %28 = vsyncadd [#allocation4], %s27
      %s30 = sshll.u32 [#allocation5], 4
      %s31 = int_to_ptr.vmem [resolvable:$true] %s30
      %33 = dma.vmem_to_hbm [thread:$0]  %s31, 128, %s1, [#allocation4]
    $region13: #{tpu_custom_call.1} parent=1 // pred_fallthru
      _
    // Predicated region
    $region14: #{tpu_custom_call.1} parent=1 // pred_check
      _
    $region15: #{tpu_custom_call.1} parent=1 // pred_check_branch
      %35 = sbr.rel (0) target = $region17
    $region16: #{tpu_custom_call.1} parent=1 // pred_region
      %36 = dma.done [#allocation4], 128
    $region17: #{tpu_custom_call.1} parent=1 // pred_fallthru
      _
    %37 = vsyncpa [#allocation3], 1
    %38 = vsyncpa [#allocation4], 1

// kernel: tpu_custom_call.1
$region0: #{tpu_custom_call.1}
  #allocation0 [shape = 'u32[]', space=smem, size = 0x4, offset = 0x4, fixed_abs, tag = 'smem constant byte address 0x4 - core index']
  #allocation1 [shape = 'u32[144,128]{1,0:T(1,128)}', space=vmem, size = 0x12000, scoped, tag = 'internal scratch']
  %s0 = inlined_call_operand.hbm [shape: f32[2,8,64], index: 0, kind: input, shape index: {}]
  %s1 = inlined_call_operand.vmem [shape: f32[1,8,64], index: 1, kind: input, shape index: {}]
  %s2 = inlined_call_operand.vmem [shape: f32[1,64], index: 2, kind: input, shape index: {}]
  %s3 = inlined_call_operand.vmem [shape: f32[1,64], index: 3, kind: input, shape index: {}]
  %s4 = inlined_call_operand.vmem [shape: bf16[64,192], index: 4, kind: input, shape index: {}]
  %s5 = inlined_call_operand.vmem [shape: f32[1,192], index: 5, kind: input, shape index: {}]
  %s6 = inlined_call_operand.vmem [shape: bf16[64,64], index: 6, kind: input, shape index: {}]
  %s7 = inlined_call_operand.vmem [shape: f32[1,64], index: 7, kind: input, shape index: {}]
  %s8 = inlined_call_operand.hbm [shape: f32[1,64], index: 8, kind: input, shape index: {}]
  %s9 = inlined_call_operand.hbm [shape: f32[1,64], index: 9, kind: input, shape index: {}]
  %s10 = inlined_call_operand.hbm [shape: bf16[64,128], index: 10, kind: input, shape index: {}]
  %s11 = inlined_call_operand.hbm [shape: f32[1,128], index: 11, kind: input, shape index: {}]
  %s12 = inlined_call_operand.vmem [shape: bf16[128,64], index: 12, kind: input, shape index: {}]
  %s13 = inlined_call_operand.vmem [shape: f32[1,64], index: 13, kind: input, shape index: {}]
  %s14 = inlined_call_operand.hbm [shape: f32[2,8,64], index: 14, kind: output, shape index: {}]
  %s15 = sld [smem:[#allocation0]]
  $region109: #{tpu_custom_call.1} parent=0
    _
  %s17 = ssub.s32 1, %s15
  %s18 = scalar_select 0, %s17, %s15
  $region1: #{tpu_custom_call.1} parent=0
    #allocation2 [shape = 'u8[8192]{0}', space=vmem, size = 0x2000, scoped, tag = 'input window, operand 0']
    #allocation3 [shape = 's32[2]{0}', space=sflag, size = 0x8, scoped, tag = 'scoped memory for tpu_custom_call.1']
    #allocation4 [shape = 's32[2]{0}', space=sflag, size = 0x8, scoped, tag = 'scoped memory for tpu_custom_call.1']
    #allocation5 [shape = 'u8[512]{0}', space=vmem, size = 0x400, scoped, tag = 'input window, operand 8, single buffered']
    #allocation6 [shape = 's32[1]{0}', space=sflag, size = 0x4, scoped, tag = 'scoped memory for tpu_custom_call.1']
    #allocation7 [shape = 'u8[512]{0}', space=vmem, size = 0x400, scoped, tag = 'input window, operand 9, single buffered']
    #allocation8 [shape = 'u8[16384]{0}', space=vmem, size = 0x4000, scoped, tag = 'input window, operand 10, single buffered']
    #allocation9 [shape = 's32[1]{0}', space=sflag, size = 0x4, scoped, tag = 'scoped memory for tpu_custom_call.1']
    #allocation10 [shape = 'u8[512]{0}', space=vmem, size = 0x400, scoped, tag = 'input window, operand 11, single buffered']
    #allocation11 [shape = 'u8[8192]{0}', space=vmem, size = 0x2000, scoped, tag = 'output window, operand 0']
    %19 = vsyncpa [#allocation3], 0
    %s20 = scalar_lea.sflag [#allocation3], 1
    %21 = vsyncpa %s20, 0
    %22 = vsyncpa [#allocation6], 0
    %23 = vsyncpa [#allocation9], 0
    %24 = vsyncpa [#allocation4], 0
    %s25 = scalar_lea.sflag [#allocation4], 1
    %26 = vsyncpa %s25, 0
    loop: start=0, step=1, limit=4
    $region2: #{tpu_custom_call.1} parent=1 // loop_pre_header
      _
    $region3: #{tpu_custom_call.1} parent=1 // loop_header
      %s28 = sphi 0, %s32
      %p29 = scmp.ge.s32.totalorder %s28, 4
      %s38 = sphi 0, %s40
      %s41 = sphi 0, %s38
      %s42 = sphi 0, %s41
      %s58 = sphi 0, %s42
      %s62 = sphi 0, %s62
      %s64 = sphi 0, %s62
      %s65 = sphi 0, %s64
      %s79 = sphi 0, %s65
      %s83 = sphi 0, %s83
      %s85 = sphi 0, %s83
      %s86 = sphi 0, %s85
      %s100 = sphi 0, %s86
      %s104 = sphi 0, %s104
      %s106 = sphi 0, %s104
      %s107 = sphi 0, %s106
      %s121 = sphi 0, %s107
      %s125 = sphi 0, %s125
      %s127 = sphi 0, %s125
      %s128 = sphi 0, %s127
      %s142 = sphi 0, %s128
      %s146 = sphi 0, %s146
      %s148 = sphi 0, %s146
      %s149 = sphi 0, %s148
      %s163 = sphi 0, %s149
      %s167 = sphi 0, %s167
      %s169 = sphi 0, %s167
      %s170 = sphi 0, %s169
      %s184 = sphi 0, %s170
      %s188 = sphi 0, %s188
      %s190 = sphi 0, %s188
      %s191 = sphi 0, %s190
      %s205 = sphi 0, %s191
      %s209 = sphi 0, %s209
      %s211 = sphi 0, %s209
      %s212 = sphi 0, %s211
      %s226 = sphi 0, %s212
      %s230 = sphi 0, %s230
      %s232 = sphi 0, %s230
      %s233 = sphi 0, %s232
      %s247 = sphi 0, %s233
      %s251 = sphi 0, %s251
      %s253 = sphi 0, %s251
      %s254 = sphi 0, %s253
      %s268 = sphi 0, %s254
      %s272 = sphi 0, %s272
      %s274 = sphi 0, %s272
      %s275 = sphi 0, %s274
      %s289 = sphi 0, %s275
      %s293 = sphi 0, %s293
      %s295 = sphi 0, %s293
      %s296 = sphi 0, %s295
      %s310 = sphi 0, %s296
      %s314 = sphi 0, %s314
      %s316 = sphi 0, %s314
      %s317 = sphi 0, %s316
      %s331 = sphi 0, %s317
      %s337 = sphi 0, %s339
      %s340 = sphi 0, %s337
      %s341 = sphi 0, %s340
      %s357 = sphi 0, %s341
    $region4: #{tpu_custom_call.1} parent=1 // loop_header_branch
      %31 = sbr.rel (%p29) target = $region8
    $region5: #{tpu_custom_call.1} parent=1 // loop_body
      %s33 = ssub.s32 %s28, 1
      %s34 = ssub.s32 %s28, 2
      %s35 = sadd.s32 %s28, 1
      %s36 = ssub.s32 %s28, %s35
      %p37 = scmp.eq.s32.totalorder %s36, 0
      %s39 = sadd.s32 %s38, 1
      %s40 = scalar_select %p37, %s38, %s39
      %p43 = pneg %p37
      %p44 = scmp.eq.s32.totalorder %s28, 1
      %p45 = por %p43, %p44
      %p46 = scmp.ne.s32.totalorder %s38, %s41
      %p47 = scmp.eq.s32.totalorder %s28, 0
      %p48 = por %p46, %p47
      %p49 = scmp.ne.s32.totalorder %s38, %s41
      %p50 = scmp.eq.s32.totalorder %s33, 1
      %p51 = por %p49, %p50
      %p52 = scmp.ne.s32.totalorder %s41, %s42
      %p53 = scmp.eq.s32.totalorder %s33, 0
      %p54 = por %p52, %p53
      %p55 = scmp.ne.s32.totalorder %s41, %s42
      %p56 = scmp.eq.s32.totalorder %s34, 1
      %p57 = por %p55, %p56
      %p59 = scmp.ne.s32.totalorder %s42, %s58
      %p60 = scmp.eq.s32.totalorder %s34, 0
      %p61 = por %p59, %p60
      %s63 = sadd.s32 %s62, 1
      %p66 = scmp.eq.s32.totalorder %s28, 1
      %p67 = scmp.ne.s32.totalorder %s62, %s64
      %p68 = scmp.eq.s32.totalorder %s28, 0
      %p69 = por %p67, %p68
      %p70 = scmp.ne.s32.totalorder %s62, %s64
      %p71 = scmp.eq.s32.totalorder %s33, 1
      %p72 = por %p70, %p71
      %p73 = scmp.ne.s32.totalorder %s64, %s65
      %p74 = scmp.eq.s32.totalorder %s33, 0
      %p75 = por %p73, %p74
      %p76 = scmp.ne.s32.totalorder %s64, %s65
      %p77 = scmp.eq.s32.totalorder %s34, 1
      %p78 = por %p76, %p77
      %p80 = scmp.ne.s32.totalorder %s65, %s79
      %p81 = scmp.eq.s32.totalorder %s34, 0
      %p82 = por %p80, %p81
      %s84 = sadd.s32 %s83, 1
      %p87 = scmp.eq.s32.totalorder %s28, 1
      %p88 = scmp.ne.s32.totalorder %s83, %s85
      %p89 = scmp.eq.s32.totalorder %s28, 0
      %p90 = por %p88, %p89
      %p91 = scmp.ne.s32.totalorder %s83, %s85
      %p92 = scmp.eq.s32.totalorder %s33, 1
      %p93 = por %p91, %p92
      %p94 = scmp.ne.s32.totalorder %s85, %s86
      %p95 = scmp.eq.s32.totalorder %s33, 0
      %p96 = por %p94, %p95
      %p97 = scmp.ne.s32.totalorder %s85, %s86
      %p98 = scmp.eq.s32.totalorder %s34, 1
      %p99 = por %p97, %p98
      %p101 = scmp.ne.s32.totalorder %s86, %s100
      %p102 = scmp.eq.s32.totalorder %s34, 0
      %p103 = por %p101, %p102
      %s105 = sadd.s32 %s104, 1
      %p108 = scmp.eq.s32.totalorder %s28, 1
      %p109 = scmp.ne.s32.totalorder %s104, %s106
      %p110 = scmp.eq.s32.totalorder %s28, 0
      %p111 = por %p109, %p110
      %p112 = scmp.ne.s32.totalorder %s104, %s106
      %p113 = scmp.eq.s32.totalorder %s33, 1
      %p114 = por %p112, %p113
      %p115 = scmp.ne.s32.totalorder %s106, %s107
      %p116 = scmp.eq.s32.totalorder %s33, 0
      %p117 = por %p115, %p116
      %p118 = scmp.ne.s32.totalorder %s106, %s107
      %p119 = scmp.eq.s32.totalorder %s34, 1
      %p120 = por %p118, %p119
      %p122 = scmp.ne.s32.totalorder %s107, %s121
      %p123 = scmp.eq.s32.totalorder %s34, 0
      %p124 = por %p122, %p123
      %s126 = sadd.s32 %s125, 1
      %p129 = scmp.eq.s32.totalorder %s28, 1
      %p130 = scmp.ne.s32.totalorder %s125, %s127
      %p131 = scmp.eq.s32.totalorder %s28, 0
      %p132 = por %p130, %p131
      %p133 = scmp.ne.s32.totalorder %s125, %s127
      %p134 = scmp.eq.s32.totalorder %s33, 1
      %p135 = por %p133, %p134
      %p136 = scmp.ne.s32.totalorder %s127, %s128
      %p137 = scmp.eq.s32.totalorder %s33, 0
      %p138 = por %p136, %p137
      %p139 = scmp.ne.s32.totalorder %s127, %s128
      %p140 = scmp.eq.s32.totalorder %s34, 1
      %p141 = por %p139, %p140
      %p143 = scmp.ne.s32.totalorder %s128, %s142
      %p144 = scmp.eq.s32.totalorder %s34, 0
      %p145 = por %p143, %p144
      %s147 = sadd.s32 %s146, 1
      %p150 = scmp.eq.s32.totalorder %s28, 1
      %p151 = scmp.ne.s32.totalorder %s146, %s148
      %p152 = scmp.eq.s32.totalorder %s28, 0
      %p153 = por %p151, %p152
      %p154 = scmp.ne.s32.totalorder %s146, %s148
      %p155 = scmp.eq.s32.totalorder %s33, 1
      %p156 = por %p154, %p155
      %p157 = scmp.ne.s32.totalorder %s148, %s149
      %p158 = scmp.eq.s32.totalorder %s33, 0
      %p159 = por %p157, %p158
      %p160 = scmp.ne.s32.totalorder %s148, %s149
      %p161 = scmp.eq.s32.totalorder %s34, 1
      %p162 = por %p160, %p161
      %p164 = scmp.ne.s32.totalorder %s149, %s163
      %p165 = scmp.eq.s32.totalorder %s34, 0
      %p166 = por %p164, %p165
      %s168 = sadd.s32 %s167, 1
      %p171 = scmp.eq.s32.totalorder %s28, 1
      %p172 = scmp.ne.s32.totalorder %s167, %s169
      %p173 = scmp.eq.s32.totalorder %s28, 0
      %p174 = por %p172, %p173
      %p175 = scmp.ne.s32.totalorder %s167, %s169
      %p176 = scmp.eq.s32.totalorder %s33, 1
      %p177 = por %p175, %p176
      %p178 = scmp.ne.s32.totalorder %s169, %s170
      %p179 = scmp.eq.s32.totalorder %s33, 0
      %p180 = por %p178, %p179
      %p181 = scmp.ne.s32.totalorder %s169, %s170
      %p182 = scmp.eq.s32.totalorder %s34, 1
      %p183 = por %p181, %p182
      %p185 = scmp.ne.s32.totalorder %s170, %s184
      %p186 = scmp.eq.s32.totalorder %s34, 0
      %p187 = por %p185, %p186
      %s189 = sadd.s32 %s188, 1
      %p192 = scmp.eq.s32.totalorder %s28, 1
      %p193 = scmp.ne.s32.totalorder %s188, %s190
      %p194 = scmp.eq.s32.totalorder %s28, 0
      %p195 = por %p193, %p194
      %p196 = scmp.ne.s32.totalorder %s188, %s190
      %p197 = scmp.eq.s32.totalorder %s33, 1
      %p198 = por %p196, %p197
      %p199 = scmp.ne.s32.totalorder %s190, %s191
      %p200 = scmp.eq.s32.totalorder %s33, 0
      %p201 = por %p199, %p200
      %p202 = scmp.ne.s32.totalorder %s190, %s191
      %p203 = scmp.eq.s32.totalorder %s34, 1
      %p204 = por %p202, %p203
      %p206 = scmp.ne.s32.totalorder %s191, %s205
      %p207 = scmp.eq.s32.totalorder %s34, 0
      %p208 = por %p206, %p207
      %s210 = sadd.s32 %s209, 1
      %p213 = scmp.eq.s32.totalorder %s28, 1
      %p214 = scmp.ne.s32.totalorder %s209, %s211
      %p215 = scmp.eq.s32.totalorder %s28, 0
      %p216 = por %p214, %p215
      %p217 = scmp.ne.s32.totalorder %s209, %s211
      %p218 = scmp.eq.s32.totalorder %s33, 1
      %p219 = por %p217, %p218
      %p220 = scmp.ne.s32.totalorder %s211, %s212
      %p221 = scmp.eq.s32.totalorder %s33, 0
      %p222 = por %p220, %p221
      %p223 = scmp.ne.s32.totalorder %s211, %s212
      %p224 = scmp.eq.s32.totalorder %s34, 1
      %p225 = por %p223, %p224
      %p227 = scmp.ne.s32.totalorder %s212, %s226
      %p228 = scmp.eq.s32.totalorder %s34, 0
      %p229 = por %p227, %p228
      %s231 = sadd.s32 %s230, 1
      %p234 = scmp.eq.s32.totalorder %s28, 1
      %p235 = scmp.ne.s32.totalorder %s230, %s232
      %p236 = scmp.eq.s32.totalorder %s28, 0
      %p237 = por %p235, %p236
      %p238 = scmp.ne.s32.totalorder %s230, %s232
      %p239 = scmp.eq.s32.totalorder %s33, 1
      %p240 = por %p238, %p239
      %p241 = scmp.ne.s32.totalorder %s232, %s233
      %p242 = scmp.eq.s32.totalorder %s33, 0
      %p243 = por %p241, %p242
      %p244 = scmp.ne.s32.totalorder %s232, %s233
      %p245 = scmp.eq.s32.totalorder %s34, 1
      %p246 = por %p244, %p245
      %p248 = scmp.ne.s32.totalorder %s233, %s247
      %p249 = scmp.eq.s32.totalorder %s34, 0
      %p250 = por %p248, %p249
      %s252 = sadd.s32 %s251, 1
      %p255 = scmp.eq.s32.totalorder %s28, 1
      %p256 = scmp.ne.s32.totalorder %s251, %s253
      %p257 = scmp.eq.s32.totalorder %s28, 0
      %p258 = por %p256, %p257
      %p259 = scmp.ne.s32.totalorder %s251, %s253
      %p260 = scmp.eq.s32.totalorder %s33, 1
      %p261 = por %p259, %p260
      %p262 = scmp.ne.s32.totalorder %s253, %s254
      %p263 = scmp.eq.s32.totalorder %s33, 0
      %p264 = por %p262, %p263
      %p265 = scmp.ne.s32.totalorder %s253, %s254
      %p266 = scmp.eq.s32.totalorder %s34, 1
      %p267 = por %p265, %p266
      %p269 = scmp.ne.s32.totalorder %s254, %s268
      %p270 = scmp.eq.s32.totalorder %s34, 0
      %p271 = por %p269, %p270
      %s273 = sadd.s32 %s272, 1
      %p276 = scmp.eq.s32.totalorder %s28, 1
      %p277 = scmp.ne.s32.totalorder %s272, %s274
      %p278 = scmp.eq.s32.totalorder %s28, 0
      %p279 = por %p277, %p278
      %p280 = scmp.ne.s32.totalorder %s272, %s274
      %p281 = scmp.eq.s32.totalorder %s33, 1
      %p282 = por %p280, %p281
      %p283 = scmp.ne.s32.totalorder %s274, %s275
      %p284 = scmp.eq.s32.totalorder %s33, 0
      %p285 = por %p283, %p284
      %p286 = scmp.ne.s32.totalorder %s274, %s275
      %p287 = scmp.eq.s32.totalorder %s34, 1
      %p288 = por %p286, %p287
      %p290 = scmp.ne.s32.totalorder %s275, %s289
      %p291 = scmp.eq.s32.totalorder %s34, 0
      %p292 = por %p290, %p291
      %s294 = sadd.s32 %s293, 1
      %p297 = scmp.eq.s32.totalorder %s28, 1
      %p298 = scmp.ne.s32.totalorder %s293, %s295
      %p299 = scmp.eq.s32.totalorder %s28, 0
      %p300 = por %p298, %p299
      %p301 = scmp.ne.s32.totalorder %s293, %s295
      %p302 = scmp.eq.s32.totalorder %s33, 1
      %p303 = por %p301, %p302
      %p304 = scmp.ne.s32.totalorder %s295, %s296
      %p305 = scmp.eq.s32.totalorder %s33, 0
      %p306 = por %p304, %p305
      %p307 = scmp.ne.s32.totalorder %s295, %s296
      %p308 = scmp.eq.s32.totalorder %s34, 1
      %p309 = por %p307, %p308
      %p311 = scmp.ne.s32.totalorder %s296, %s310
      %p312 = scmp.eq.s32.totalorder %s34, 0
      %p313 = por %p311, %p312
      %s315 = sadd.s32 %s314, 1
      %p318 = scmp.eq.s32.totalorder %s28, 1
      %p319 = scmp.ne.s32.totalorder %s314, %s316
      %p320 = scmp.eq.s32.totalorder %s28, 0
      %p321 = por %p319, %p320
      %p322 = scmp.ne.s32.totalorder %s314, %s316
      %p323 = scmp.eq.s32.totalorder %s33, 1
      %p324 = por %p322, %p323
      %p325 = scmp.ne.s32.totalorder %s316, %s317
      %p326 = scmp.eq.s32.totalorder %s33, 0
      %p327 = por %p325, %p326
      %p328 = scmp.ne.s32.totalorder %s316, %s317
      %p329 = scmp.eq.s32.totalorder %s34, 1
      %p330 = por %p328, %p329
      %p332 = scmp.ne.s32.totalorder %s317, %s331
      %p333 = scmp.eq.s32.totalorder %s34, 0
      %p334 = por %p332, %p333
      %s335 = ssub.s32 %s28, %s35
      %p336 = scmp.eq.s32.totalorder %s335, 0
      %s338 = sadd.s32 %s337, 1
      %s339 = scalar_select %p336, %s337, %s338
      %p342 = pneg %p336
      %p343 = scmp.eq.s32.totalorder %s28, 1
      %p344 = por %p342, %p343
      %p345 = scmp.ne.s32.totalorder %s337, %s340
      %p346 = scmp.eq.s32.totalorder %s28, 0
      %p347 = por %p345, %p346
      %p348 = scmp.ne.s32.totalorder %s337, %s340
      %p349 = scmp.eq.s32.totalorder %s33, 1
      %p350 = por %p348, %p349
      %p351 = scmp.ne.s32.totalorder %s340, %s341
      %p352 = scmp.eq.s32.totalorder %s33, 0
      %p353 = por %p351, %p352
      %p354 = scmp.ne.s32.totalorder %s340, %s341
      %p355 = scmp.eq.s32.totalorder %s34, 1
      %p356 = por %p354, %p355
      %p358 = scmp.ne.s32.totalorder %s341, %s357
      %p359 = scmp.eq.s32.totalorder %s34, 0
      %p360 = por %p358, %p359
      %p361 = scmp.le.s32.totalorder 1, %s28
      %p362 = scmp.lt.s32.totalorder %s28, 3
      %p363 = pnand %p361, %p362
      %p364 = pneg %p363
      // Predicated region
      $region9: #{tpu_custom_call.1} parent=5 // pred_check
        _
      $region10: #{tpu_custom_call.1} parent=5 // pred_check_branch
        %366 = sbr.rel (%p363) target = $region12
      $region11: #{tpu_custom_call.1} parent=5 // pred_region
        %s367 = ssub.s32 %s28, 1
        // Predicated region
        $region13: #{tpu_custom_call.1} parent=11 // pred_check
          %p368 = pneg %p75
        $region14: #{tpu_custom_call.1} parent=11 // pred_check_branch
          %370 = sbr.rel (%p368) target = $region16
        $region15: #{tpu_custom_call.1} parent=11 // pred_region
          _
        $region16: #{tpu_custom_call.1} parent=11 // pred_fallthru
          _
        // Predicated region
        $region17: #{tpu_custom_call.1} parent=11 // pred_check
          %p371 = pneg %p96
        $region18: #{tpu_custom_call.1} parent=11 // pred_check_branch
          %373 = sbr.rel (%p371) target = $region20
        $region19: #{tpu_custom_call.1} parent=11 // pred_region
          _
        $region20: #{tpu_custom_call.1} parent=11 // pred_fallthru
          _
        // Predicated region
        $region21: #{tpu_custom_call.1} parent=11 // pred_check
          %p374 = pneg %p117
        $region22: #{tpu_custom_call.1} parent=11 // pred_check_branch
          %376 = sbr.rel (%p374) target = $region24
        $region23: #{tpu_custom_call.1} parent=11 // pred_region
          _
        $region24: #{tpu_custom_call.1} parent=11 // pred_fallthru
          _
        // Predicated region
        $region25: #{tpu_custom_call.1} parent=11 // pred_check
          %p377 = pneg %p138
        $region26: #{tpu_custom_call.1} parent=11 // pred_check_branch
          %379 = sbr.rel (%p377) target = $region28
        $region27: #{tpu_custom_call.1} parent=11 // pred_region
          _
        $region28: #{tpu_custom_call.1} parent=11 // pred_fallthru
          _
        // Predicated region
        $region29: #{tpu_custom_call.1} parent=11 // pred_check
          %p380 = pneg %p159
        $region30: #{tpu_custom_call.1} parent=11 // pred_check_branch
          %382 = sbr.rel (%p380) target = $region32
        $region31: #{tpu_custom_call.1} parent=11 // pred_region
          _
        $region32: #{tpu_custom_call.1} parent=11 // pred_fallthru
          _
        // Predicated region
        $region33: #{tpu_custom_call.1} parent=11 // pred_check
          %p383 = pneg %p180
        $region34: #{tpu_custom_call.1} parent=11 // pred_check_branch
          %385 = sbr.rel (%p383) target = $region36
        $region35: #{tpu_custom_call.1} parent=11 // pred_region
          _
        $region36: #{tpu_custom_call.1} parent=11 // pred_fallthru
          _
        // Predicated region
        $region37: #{tpu_custom_call.1} parent=11 // pred_check
          %p386 = pneg %p201
        $region38: #{tpu_custom_call.1} parent=11 // pred_check_branch
          %388 = sbr.rel (%p386) target = $region40
        $region39: #{tpu_custom_call.1} parent=11 // pred_region
          _
        $region40: #{tpu_custom_call.1} parent=11 // pred_fallthru
          _
        // Predicated region
        $region41: #{tpu_custom_call.1} parent=11 // pred_check
          %p389 = pneg %p222
        $region42: #{tpu_custom_call.1} parent=11 // pred_check_branch
          %391 = sbr.rel (%p389) target = $region44
        $region43: #{tpu_custom_call.1} parent=11 // pred_region
          %s393 = ssub.s32 16, 16
          %394 = vsyncadd [#allocation6], %s393
          %s396 = sshll.u32 [#allocation5], 4
          %s397 = int_to_ptr.vmem [resolvable:$true] %s396
          %399 = dma.hbm_to_vmem [thread:$0]  %s8, 16, %s397, [#allocation6]
        $region44: #{tpu_custom_call.1} parent=11 // pred_fallthru
          _
        // Predicated region
        $region45: #{tpu_custom_call.1} parent=11 // pred_check
          %p400 = pneg %p243
        $region46: #{tpu_custom_call.1} parent=11 // pred_check_branch
          %402 = sbr.rel (%p400) target = $region48
        $region47: #{tpu_custom_call.1} parent=11 // pred_region
          %s404 = ssub.s32 16, 16
          %405 = vsyncadd [#allocation6], %s404
          %s407 = sshll.u32 [#allocation7], 4
          %s408 = int_to_ptr.vmem [resolvable:$true] %s407
          %410 = dma.hbm_to_vmem [thread:$0]  %s9, 16, %s408, [#allocation6]
        $region48: #{tpu_custom_call.1} parent=11 // pred_fallthru
          _
        // Predicated region
        $region49: #{tpu_custom_call.1} parent=11 // pred_check
          %p411 = pneg %p264
        $region50: #{tpu_custom_call.1} parent=11 // pred_check_branch
          %413 = sbr.rel (%p411) target = $region52
        $region51: #{tpu_custom_call.1} parent=11 // pred_region
          %s415 = ssub.s32 512, 512
          %416 = vsyncadd [#allocation9], %s415
          %s417 = sshll.u32 [#allocation8], 4
          %s418 = int_to_ptr.vmem [resolvable:$true] %s417
          %423 = dma.hbm_to_vmem [thread:$0]  %s10, 512, %s418, [#allocation9], 64, 64, 4
        $region52: #{tpu_custom_call.1} parent=11 // pred_fallthru
          _
        // Predicated region
        $region53: #{tpu_custom_call.1} parent=11 // pred_check
          %p424 = pneg %p285
        $region54: #{tpu_custom_call.1} parent=11 // pred_check_branch
          %426 = sbr.rel (%p424) target = $region56
        $region55: #{tpu_custom_call.1} parent=11 // pred_region
          %s428 = ssub.s32 16, 16
          %429 = vsyncadd [#allocation9], %s428
          %s431 = sshll.u32 [#allocation10], 4
          %s432 = int_to_ptr.vmem [resolvable:$true] %s431
          %434 = dma.hbm_to_vmem [thread:$0]  %s11, 16, %s432, [#allocation9]
        $region56: #{tpu_custom_call.1} parent=11 // pred_fallthru
          _
        // Predicated region
        $region57: #{tpu_custom_call.1} parent=11 // pred_check
          %p435 = pneg %p306
        $region58: #{tpu_custom_call.1} parent=11 // pred_check_branch
          %437 = sbr.rel (%p435) target = $region60
        $region59: #{tpu_custom_call.1} parent=11 // pred_region
          _
        $region60: #{tpu_custom_call.1} parent=11 // pred_fallthru
          _
        // Predicated region
        $region61: #{tpu_custom_call.1} parent=11 // pred_check
          %p438 = pneg %p327
        $region62: #{tpu_custom_call.1} parent=11 // pred_check_branch
          %440 = sbr.rel (%p438) target = $region64
        $region63: #{tpu_custom_call.1} parent=11 // pred_region
          _
        $region64: #{tpu_custom_call.1} parent=11 // pred_fallthru
          _
      $region12: #{tpu_custom_call.1} parent=5 // pred_fallthru
        _
      %p441 = scmp.lt.s32.totalorder %s28, 2
      // Predicated region
      $region65: #{tpu_custom_call.1} parent=5 // pred_check
        %p442 = pneg %p441
      $region66: #{tpu_custom_call.1} parent=5 // pred_check_branch
        %444 = sbr.rel (%p442) target = $region68
      $region67: #{tpu_custom_call.1} parent=5 // pred_region
        // Predicated region
        $region69: #{tpu_custom_call.1} parent=67 // pred_check
          %p445 = pneg %p48
        $region70: #{tpu_custom_call.1} parent=67 // pred_check_branch
          %447 = sbr.rel (%p445) target = $region72
        $region71: #{tpu_custom_call.1} parent=67 // pred_region
          %s448 = sand.u32 %s38, 1
          %s449 = scalar_lea.sflag [#allocation3], %s448
          %s450 = sand.u32 %s38, 1
          %s451 = smul.addr %s450, 8
          %s452 = scalar_lea.vmem [#allocation2], %s451
          %s454 = ssub.s32 128, 128
          %455 = vsyncadd %s449, %s454
          %s456 = smul.addr %s28, 128
          %s457 = scalar_lea.hbm %s0, %s456
          %s459 = sshll.u32 %s452, 4
          %s460 = int_to_ptr.vmem [resolvable:$true] %s459
          %462 = dma.hbm_to_vmem [thread:$0]  %s457, 128, %s460, %s449
        $region72: #{tpu_custom_call.1} parent=67 // pred_fallthru
          _
      $region68: #{tpu_custom_call.1} parent=5 // pred_fallthru
        _
      %p463 = scmp.le.s32.totalorder 1, %s28
      %p464 = scmp.lt.s32.totalorder %s28, 3
      %p465 = pnand %p463, %p464
      %p466 = pneg %p465
      // Predicated region
      $region73: #{tpu_custom_call.1} parent=5 // pred_check
        _
      $region74: #{tpu_custom_call.1} parent=5 // pred_check_branch
        %468 = sbr.rel (%p465) target = $region76
      $region75: #{tpu_custom_call.1} parent=5 // pred_region
        %s469 = ssub.s32 %s28, 1
        %s470 = sand.u32 %s41, 1
        %s471 = scalar_lea.sflag [#allocation3], %s470
        %s472 = sand.u32 %s41, 1
        %s473 = smul.addr %s472, 8
        %s474 = scalar_lea.vmem [#allocation2], %s473
        // Predicated region
        $region77: #{tpu_custom_call.1} parent=75 // pred_check
          %p475 = pneg %p54
        $region78: #{tpu_custom_call.1} parent=75 // pred_check_branch
          %477 = sbr.rel (%p475) target = $region80
        $region79: #{tpu_custom_call.1} parent=75 // pred_region
          %478 = dma.done %s471, 128
        $region80: #{tpu_custom_call.1} parent=75 // pred_fallthru
          _
        // Predicated region
        $region81: #{tpu_custom_call.1} parent=75 // pred_check
          %p479 = pneg %p222
        $region82: #{tpu_custom_call.1} parent=75 // pred_check_branch
          %481 = sbr.rel (%p479) target = $region84
        $region83: #{tpu_custom_call.1} parent=75 // pred_region
          %482 = dma.done [#allocation6], 16
        $region84: #{tpu_custom_call.1} parent=75 // pred_fallthru
          _
        // Predicated region
        $region85: #{tpu_custom_call.1} parent=75 // pred_check
          %p483 = pneg %p243
        $region86: #{tpu_custom_call.1} parent=75 // pred_check_branch
          %485 = sbr.rel (%p483) target = $region88
        $region87: #{tpu_custom_call.1} parent=75 // pred_region
          %486 = dma.done [#allocation6], 16
        $region88: #{tpu_custom_call.1} parent=75 // pred_fallthru
          _
        // Predicated region
        $region89: #{tpu_custom_call.1} parent=75 // pred_check
          %p487 = pneg %p264
        $region90: #{tpu_custom_call.1} parent=75 // pred_check_branch
          %489 = sbr.rel (%p487) target = $region92
        $region91: #{tpu_custom_call.1} parent=75 // pred_region
          %490 = dma.done [#allocation9], 512
        $region92: #{tpu_custom_call.1} parent=75 // pred_fallthru
          _
        // Predicated region
        $region93: #{tpu_custom_call.1} parent=75 // pred_check
          %p491 = pneg %p285
        $region94: #{tpu_custom_call.1} parent=75 // pred_check_branch
          %493 = sbr.rel (%p491) target = $region96
        $region95: #{tpu_custom_call.1} parent=75 // pred_region
          %494 = dma.done [#allocation9], 16
        $region96: #{tpu_custom_call.1} parent=75 // pred_fallthru
          _
        %s495 = sand.u32 %s41, 1
        %s496 = scalar_lea.sflag [#allocation3], %s495
        %s497 = sand.u32 %s41, 1
        %s498 = smul.addr %s497, 8
        %s499 = scalar_lea.vmem [#allocation2], %s498
        %p500 = pneg %p54
        %p501 = pneg %p51
        %p502 = pneg %p75
        %p503 = pneg %p72
        %p504 = pneg %p96
        %p505 = pneg %p93
        %p506 = pneg %p117
        %p507 = pneg %p114
        %p508 = pneg %p138
        %p509 = pneg %p135
        %p510 = pneg %p159
        %p511 = pneg %p156
        %p512 = pneg %p180
        %p513 = pneg %p177
        %p514 = pneg %p201
        %p515 = pneg %p198
        %p516 = pneg %p222
        %p517 = pneg %p219
        %p518 = pneg %p243
        %p519 = pneg %p240
        %p520 = pneg %p264
        %p521 = pneg %p261
        %p522 = pneg %p285
        %p523 = pneg %p282
        %p524 = pneg %p306
        %p525 = pneg %p303
        %p526 = pneg %p327
        %p527 = pneg %p324
        %p528 = pneg %p353
        %p529 = pneg %p350
        %s530 = sand.u32 %s340, 1
        %s531 = scalar_lea.sflag [#allocation4], %s530
        %s532 = sand.u32 %s340, 1
        %s533 = smul.addr %s532, 8
        %s534 = scalar_lea.vmem [#allocation11], %s533
        %v536 = vld [vmem:[%s474] sm:$0xff]
        %v537 = vld [vmem:[%s1] sm:$0xff]
        %v538 = vadd.f32 %v536, %v537
        %v539 = vld [vmem:[%s2] sm:$0x1]
        %v540 = vld [vmem:[%s3] sm:$0x1]
        %vm541 = vcmask 523264
        %v542 = vsel %vm541, %v538, 0.0
        %543 = vadd.xlane.f32.xlu0 %v542
        %v544 = vpop.xlane.xlu0 %543
        %v545 = vrcp.pop 64.0
        %v546 = vmul.f32 %v544, %v545
        %v547 = vsub.f32 %v538, %v546
        %v548 = vmul.f32 %v547, %v547
        %v549 = vsel %vm541, %v548, 0.0
        %550 = vadd.xlane.f32.xlu0 %v549
        %v551 = vpop.xlane.xlu0 %550
        %v552 = vmul.f32 %v551, %v545
        %v553 = vadd.f32 %v552, 1e-06
        %v554 = vrsqrt.pop %v553
        %v555 = vmul.f32 %v547, %v554
        %v557 = vlaneseq
        %v558 = vshrl.u32 %v557, 7
        %v559 = vsub.s32 0, %v558
        %v560 = vrot.slane %v539, %v559
        %v562 = vmul.f32 %v555, %v560
        %v564 = vlaneseq
        %v565 = vshrl.u32 %v564, 7
        %v566 = vsub.s32 0, %v565
        %v567 = vrot.slane %v540, %v566
        %v569 = vadd.f32 %v562, %v567
        %v570 = vpack.c.bf16 %v569, %v569
        %v571 = vld [vmem:[%s4] sm:$0xff]
        %v572 = vld [vmem:[%s4 + $0x8] sm:$0xff]
        %v573 = vld [vmem:[%s4 + $0x10] sm:$0xff]
        %v574 = vld [vmem:[%s4 + $0x18] sm:$0xff]
        %v575 = vld [vmem:[%s4 + $0x20] sm:$0xff]
        %v576 = vld [vmem:[%s4 + $0x28] sm:$0xff]
        %v577 = vld [vmem:[%s4 + $0x30] sm:$0xff]
        %v578 = vld [vmem:[%s4 + $0x38] sm:$0xff]
        %v579 = vld [vmem:[%s5] sm:$0x3]
        %v581 = vlaneseq
        %v582 = vshrl.u32 %v581, 7
        %v583 = vsub.s32 0, %v582
        %v584 = vrot.slane %v579, %v583
        %v585 = vlaneseq
        %v586 = vshrl.u32 %v585, 7
        %v587 = vsub.s32 1, %v586
        %v588 = vrot.slane %v579, %v587
        %v599 = vunpack.c.l.b16 %v571
        %v600 = vunpack.c.h.b16 %v571
        %v601 = vunpack.c.l.b16 %v572
        %v602 = vunpack.c.h.b16 %v572
        %v603 = vunpack.c.l.b16 %v573
        %v604 = vunpack.c.h.b16 %v573
        %v605 = vunpack.c.l.b16 %v574
        %v606 = vunpack.c.h.b16 %v574
        %v607 = vunpack.c.l.b16 %v575
        %v608 = vunpack.c.h.b16 %v575
        %v609 = vunpack.c.l.b16 %v576
        %v610 = vunpack.c.h.b16 %v576
        %v611 = vunpack.c.l.b16 %v577
        %v612 = vunpack.c.h.b16 %v577
        %v613 = vunpack.c.l.b16 %v578
        %v614 = vunpack.c.h.b16 %v578
        %v615 = vpack.c.b16 %v601, %v599
        %v616 = vpack.c.b16 %v602, %v600
        %v617 = vpack.c.b16 %v605, %v603
        %v618 = vpack.c.b16 %v606, %v604
        %v619 = vpack.c.b16 %v609, %v607
        %v620 = vpack.c.b16 %v610, %v608
        %v621 = vpack.c.b16 %v613, %v611
        %v622 = vpack.c.b16 %v614, %v612
        %v632 = vsel %vm541, %v570, 0
        %634 = vmatprep.subr.bf16.mxu0 %v616
        %635 = vmatpush1.bf16.msra.mxu0 %v615
        %636 = vmatprep.subr.bf16.mxu0 %v618
        %637 = vmatpush1.bf16.msra.mxu0 %v617
        %638 = vmatprep.subr.bf16.mxu0 %v620
        %639 = vmatpush1.bf16.msra.mxu0 %v619
        %640 = vmatprep.subr.bf16.mxu0 %v622
        %641 = vmatpush1.bf16.msra.mxu0 %v621
        %642 = vmatprep.subr.bf16.mxu0 0
        %643 = vmatpush1.bf16.msra.mxu0 0
        %644 = vmatprep.subr.bf16.mxu0 0
        %645 = vmatpush1.bf16.msra.mxu0 0
        %646 = vmatprep.subr.bf16.mxu0 0
        %647 = vmatpush1.bf16.msra.mxu0 0
        %648 = vmatprep.subr.bf16.mxu0 0
        %649 = vmatpush1.bf16.msra.mxu0 0
        %650 = vmatprep.subr.bf16.mxu0 0
        %651 = vmatpush1.bf16.msra.mxu0 0
        %652 = vmatprep.subr.bf16.mxu0 0
        %653 = vmatpush1.bf16.msra.mxu0 0
        %654 = vmatprep.subr.bf16.mxu0 0
        %655 = vmatpush1.bf16.msra.mxu0 0
        %656 = vmatprep.subr.bf16.mxu0 0
        %657 = vmatpush1.bf16.msra.mxu0 0
        %658 = vmatprep.subr.bf16.mxu0 0
        %659 = vmatpush1.bf16.msra.mxu0 0
        %660 = vmatprep.subr.bf16.mxu0 0
        %661 = vmatpush1.bf16.msra.mxu0 0
        %662 = vmatprep.subr.bf16.mxu0 0
        %663 = vmatpush1.bf16.msra.mxu0 0
        %664 = vmatprep.subr.bf16.mxu0 0
        %665 = vmatpush1.bf16.msra.mxu0 0
        %666 = vmatprep.mubr.bf16.mxu0 0
        %667 = vmatmul.mubr.bf16.gmra.mrb[0].mxu0 %v632
        %v668 = vpop.f32.mrb[0].mxu0
        %v669 = vadd.f32 %v584, %v668
        %v670 = vpop.f32.mrb[0].mxu0
        %v671 = vadd.f32 %v588, %v670
        %v672 = vpop.f32.mrb[0].mxu0
        %v673 = vpop.f32.mrb[0].mxu0
        %674 = vdwg.mxu0
        %v675 = vpack.c.bf16 %v669, %v669
        %v676 = vpack.c.bf16 %v671, %v671
        %678 = vrot.lane.b32.xlu0 %v675, 64
        %v679 = vpop.permute.xlu0 %678
        %vm680 = vcmask 130048
        %v682 = vsel %vm680, %v675, 0
        %v685 = vsel %vm680, %v679, 0
        %687 = vmatprep.subr.bf16.mxu0 0
        %688 = vmatpush1.bf16.xpose.msra.mxu0 %v685
        %689 = vmatprep.subr.bf16.mxu0 0
        %690 = vmatpush1.bf16.xpose.msra.mxu0 0
        %691 = vmatprep.subr.bf16.mxu0 0
        %692 = vmatpush1.bf16.xpose.msra.mxu0 0
        %693 = vmatprep.subr.bf16.mxu0 0
        %694 = vmatpush1.bf16.xpose.msra.mxu0 0
        %695 = vmatprep.subr.bf16.mxu0 0
        %696 = vmatpush1.bf16.xpose.msra.mxu0 0
        %697 = vmatprep.subr.bf16.mxu0 0
        %698 = vmatpush1.bf16.xpose.msra.mxu0 0
        %699 = vmatprep.subr.bf16.mxu0 0
        %700 = vmatpush1.bf16.xpose.msra.mxu0 0
        %701 = vmatprep.subr.bf16.mxu0 0
        %702 = vmatpush1.bf16.xpose.msra.mxu0 0
        %703 = vmatprep.subr.bf16.mxu0 0
        %704 = vmatpush1.bf16.xpose.msra.mxu0 0
        %705 = vmatprep.subr.bf16.mxu0 0
        %706 = vmatpush1.bf16.xpose.msra.mxu0 0
        %707 = vmatprep.subr.bf16.mxu0 0
        %708 = vmatpush1.bf16.xpose.msra.mxu0 0
        %709 = vmatprep.subr.bf16.mxu0 0
        %710 = vmatpush1.bf16.xpose.msra.mxu0 0
        %711 = vmatprep.subr.bf16.mxu0 0
        %712 = vmatpush1.bf16.xpose.msra.mxu0 0
        %713 = vmatprep.subr.bf16.mxu0 0
        %714 = vmatpush1.bf16.xpose.msra.mxu0 0
        %715 = vmatprep.subr.bf16.mxu0 0
        %716 = vmatpush1.bf16.xpose.msra.mxu0 0
        %717 = vmatprep.subr.bf16.mxu0 0
        %718 = vmatpush1.bf16.xpose.msra.mxu0 0
        %719 = vmatprep.mubr.bf16.mxu0 0
        %720 = vmatmul.mubr.bf16.gmra.mrb[0].mxu0 %v682
        %v721 = vpop.f32.mrb[0].mxu0
        %v722 = vadd.f32 0.0, %v721
        %v723 = vpop.f32.mrb[0].mxu0
        %v724 = vpop.f32.mrb[0].mxu0
        %v725 = vpop.f32.mrb[0].mxu0
        %726 = vdwg.mxu0
        %v727 = vmul.f32 %v722, 0.25
        %vm728 = vcmask 64512
        %v729 = vsel %vm728, %v727, -inf
        %730 = vmax.xlane.f32.xlu0 %v729
        %v731 = vpop.xlane.xlu0 %730
        %v732 = vsub.f32 %v727, %v731
        %v733 = vmul.f32 %v732, 1.442695
        %v734 = vpow.pop %v733
        %v735 = vsel %vm728, %v734, 0.0
        %736 = vadd.xlane.f32.xlu0 %v735
        %v737 = vpop.xlane.xlu0 %736
        %v738 = vrcp.pop %v737
        %v739 = vmul.f32 %v734, %v738
        %v740 = vpack.c.bf16 %v739, %v739
        %v742 = vsel %vm728, %v740, 0
        %vm744 = vcmask 1043456
        %v746 = vsel %vm744, %v676, 0
        %748 = vmatprep.subr.bf16.mxu0 0
        %749 = vmatpush1.bf16.msra.mxu0 %v746
        %750 = vmatprep.subr.bf16.mxu0 0
        %751 = vmatpush1.bf16.msra.mxu0 0
        %752 = vmatprep.subr.bf16.mxu0 0
        %753 = vmatpush1.bf16.msra.mxu0 0
        %754 = vmatprep.subr.bf16.mxu0 0
        %755 = vmatpush1.bf16.msra.mxu0 0
        %756 = vmatprep.subr.bf16.mxu0 0
        %757 = vmatpush1.bf16.msra.mxu0 0
        %758 = vmatprep.subr.bf16.mxu0 0
        %759 = vmatpush1.bf16.msra.mxu0 0
        %760 = vmatprep.subr.bf16.mxu0 0
        %761 = vmatpush1.bf16.msra.mxu0 0
        %762 = vmatprep.subr.bf16.mxu0 0
        %763 = vmatpush1.bf16.msra.mxu0 0
        %764 = vmatprep.subr.bf16.mxu0 0
        %765 = vmatpush1.bf16.msra.mxu0 0
        %766 = vmatprep.subr.bf16.mxu0 0
        %767 = vmatpush1.bf16.msra.mxu0 0
        %768 = vmatprep.subr.bf16.mxu0 0
        %769 = vmatpush1.bf16.msra.mxu0 0
        %770 = vmatprep.subr.bf16.mxu0 0
        %771 = vmatpush1.bf16.msra.mxu0 0
        %772 = vmatprep.subr.bf16.mxu0 0
        %773 = vmatpush1.bf16.msra.mxu0 0
        %774 = vmatprep.subr.bf16.mxu0 0
        %775 = vmatpush1.bf16.msra.mxu0 0
        %776 = vmatprep.subr.bf16.mxu0 0
        %777 = vmatpush1.bf16.msra.mxu0 0
        %778 = vmatprep.subr.bf16.mxu0 0
        %779 = vmatpush1.bf16.msra.mxu0 0
        %780 = vmatprep.mubr.bf16.mxu0 0
        %781 = vmatmul.mubr.bf16.gmra.mrb[0].mxu0 %v742
        %v782 = vpop.f32.mrb[0].mxu0
        %v783 = vadd.f32 0.0, %v782
        %v784 = vpop.f32.mrb[0].mxu0
        %v785 = vpop.f32.mrb[0].mxu0
        %v786 = vpop.f32.mrb[0].mxu0
        %787 = vdwg.mxu0
        %v788 = vpack.c.bf16 %v783, %v783
        %789 = vrot.lane.b32.xlu0 %v675, 112
        %v790 = vpop.permute.xlu0 %789
        %791 = vrot.lane.b32.xlu0 %v675, 48
        %v792 = vpop.permute.xlu0 %791
        %v794 = vsel %vm680, %v790, 0
        %v797 = vsel %vm680, %v792, 0
        %799 = vmatprep.subr.bf16.mxu0 0
        %800 = vmatpush1.bf16.xpose.msra.mxu0 %v797
        %801 = vmatprep.subr.bf16.mxu0 0
        %802 = vmatpush1.bf16.xpose.msra.mxu0 0
        %803 = vmatprep.subr.bf16.mxu0 0
        %804 = vmatpush1.bf16.xpose.msra.mxu0 0
        %805 = vmatprep.subr.bf16.mxu0 0
        %806 = vmatpush1.bf16.xpose.msra.mxu0 0
        %807 = vmatprep.subr.bf16.mxu0 0
        %808 = vmatpush1.bf16.xpose.msra.mxu0 0
        %809 = vmatprep.subr.bf16.mxu0 0
        %810 = vmatpush1.bf16.xpose.msra.mxu0 0
        %811 = vmatprep.subr.bf16.mxu0 0
        %812 = vmatpush1.bf16.xpose.msra.mxu0 0
        %813 = vmatprep.subr.bf16.mxu0 0
        %814 = vmatpush1.bf16.xpose.msra.mxu0 0
        %815 = vmatprep.subr.bf16.mxu0 0
        %816 = vmatpush1.bf16.xpose.msra.mxu0 0
        %817 = vmatprep.subr.bf16.mxu0 0
        %818 = vmatpush1.bf16.xpose.msra.mxu0 0
        %819 = vmatprep.subr.bf16.mxu0 0
        %820 = vmatpush1.bf16.xpose.msra.mxu0 0
        %821 = vmatprep.subr.bf16.mxu0 0
        %822 = vmatpush1.bf16.xpose.msra.mxu0 0
        %823 = vmatprep.subr.bf16.mxu0 0
        %824 = vmatpush1.bf16.xpose.msra.mxu0 0
        %825 = vmatprep.subr.bf16.mxu0 0
        %826 = vmatpush1.bf16.xpose.msra.mxu0 0
        %827 = vmatprep.subr.bf16.mxu0 0
        %828 = vmatpush1.bf16.xpose.msra.mxu0 0
        %829 = vmatprep.subr.bf16.mxu0 0
        %830 = vmatpush1.bf16.xpose.msra.mxu0 0
        %831 = vmatprep.mubr.bf16.mxu0 0
        %832 = vmatmul.mubr.bf16.gmra.mrb[0].mxu0 %v794
        %v833 = vpop.f32.mrb[0].mxu0
        %v834 = vadd.f32 0.0, %v833
        %v835 = vpop.f32.mrb[0].mxu0
        %v836 = vpop.f32.mrb[0].mxu0
        %v837 = vpop.f32.mrb[0].mxu0
        %838 = vdwg.mxu0
        %v839 = vmul.f32 %v834, 0.25
        %v840 = vsel %vm728, %v839, -inf
        %841 = vmax.xlane.f32.xlu0 %v840
        %v842 = vpop.xlane.xlu0 %841
        %v843 = vsub.f32 %v839, %v842
        %v844 = vmul.f32 %v843, 1.442695
        %v845 = vpow.pop %v844
        %v846 = vsel %vm728, %v845, 0.0
        %847 = vadd.xlane.f32.xlu0 %v846
        %v848 = vpop.xlane.xlu0 %847
        %v849 = vrcp.pop %v848
        %v850 = vmul.f32 %v845, %v849
        %v851 = vpack.c.bf16 %v850, %v850
        %853 = vrot.lane.b32.xlu0 %v676, 112
        %v854 = vpop.permute.xlu0 %853
        %v856 = vsel %vm728, %v851, 0
        %v859 = vsel %vm744, %v854, 0
        %861 = vmatprep.subr.bf16.mxu0 0
        %862 = vmatpush1.bf16.msra.mxu0 %v859
        %863 = vmatprep.subr.bf16.mxu0 0
        %864 = vmatpush1.bf16.msra.mxu0 0
        %865 = vmatprep.subr.bf16.mxu0 0
        %866 = vmatpush1.bf16.msra.mxu0 0
        %867 = vmatprep.subr.bf16.mxu0 0
        %868 = vmatpush1.bf16.msra.mxu0 0
        %869 = vmatprep.subr.bf16.mxu0 0
        %870 = vmatpush1.bf16.msra.mxu0 0
        %871 = vmatprep.subr.bf16.mxu0 0
        %872 = vmatpush1.bf16.msra.mxu0 0
        %873 = vmatprep.subr.bf16.mxu0 0
        %874 = vmatpush1.bf16.msra.mxu0 0
        %875 = vmatprep.subr.bf16.mxu0 0
        %876 = vmatpush1.bf16.msra.mxu0 0
        %877 = vmatprep.subr.bf16.mxu0 0
        %878 = vmatpush1.bf16.msra.mxu0 0
        %879 = vmatprep.subr.bf16.mxu0 0
        %880 = vmatpush1.bf16.msra.mxu0 0
        %881 = vmatprep.subr.bf16.mxu0 0
        %882 = vmatpush1.bf16.msra.mxu0 0
        %883 = vmatprep.subr.bf16.mxu0 0
        %884 = vmatpush1.bf16.msra.mxu0 0
        %885 = vmatprep.subr.bf16.mxu0 0
        %886 = vmatpush1.bf16.msra.mxu0 0
        %887 = vmatprep.subr.bf16.mxu0 0
        %888 = vmatpush1.bf16.msra.mxu0 0
        %889 = vmatprep.subr.bf16.mxu0 0
        %890 = vmatpush1.bf16.msra.mxu0 0
        %891 = vmatprep.subr.bf16.mxu0 0
        %892 = vmatpush1.bf16.msra.mxu0 0
        %893 = vmatprep.mubr.bf16.mxu0 0
        %894 = vmatmul.mubr.bf16.gmra.mrb[0].mxu0 %v856
        %v895 = vpop.f32.mrb[0].mxu0
        %v896 = vadd.f32 0.0, %v895
        %v897 = vpop.f32.mrb[0].mxu0
        %v898 = vpop.f32.mrb[0].mxu0
        %v899 = vpop.f32.mrb[0].mxu0
        %900 = vdwg.mxu0
        %v901 = vpack.c.bf16 %v896, %v896
        %902 = vrot.lane.b32.xlu0 %v675, 96
        %v903 = vpop.permute.xlu0 %902
        %904 = vrot.lane.b32.xlu0 %v675, 32
        %v905 = vpop.permute.xlu0 %904
        %v907 = vsel %vm680, %v903, 0
        %v910 = vsel %vm680, %v905, 0
        %912 = vmatprep.subr.bf16.mxu0 0
        %913 = vmatpush1.bf16.xpose.msra.mxu0 %v910
        %914 = vmatprep.subr.bf16.mxu0 0
        %915 = vmatpush1.bf16.xpose.msra.mxu0 0
        %916 = vmatprep.subr.bf16.mxu0 0
        %917 = vmatpush1.bf16.xpose.msra.mxu0 0
        %918 = vmatprep.subr.bf16.mxu0 0
        %919 = vmatpush1.bf16.xpose.msra.mxu0 0
        %920 = vmatprep.subr.bf16.mxu0 0
        %921 = vmatpush1.bf16.xpose.msra.mxu0 0
        %922 = vmatprep.subr.bf16.mxu0 0
        %923 = vmatpush1.bf16.xpose.msra.mxu0 0
        %924 = vmatprep.subr.bf16.mxu0 0
        %925 = vmatpush1.bf16.xpose.msra.mxu0 0
        %926 = vmatprep.subr.bf16.mxu0 0
        %927 = vmatpush1.bf16.xpose.msra.mxu0 0
        %928 = vmatprep.subr.bf16.mxu0 0
        %929 = vmatpush1.bf16.xpose.msra.mxu0 0
        %930 = vmatprep.subr.bf16.mxu0 0
        %931 = vmatpush1.bf16.xpose.msra.mxu0 0
        %932 = vmatprep.subr.bf16.mxu0 0
        %933 = vmatpush1.bf16.xpose.msra.mxu0 0
        %934 = vmatprep.subr.bf16.mxu0 0
        %935 = vmatpush1.bf16.xpose.msra.mxu0 0
        %936 = vmatprep.subr.bf16.mxu0 0
        %937 = vmatpush1.bf16.xpose.msra.mxu0 0
        %938 = vmatprep.subr.bf16.mxu0 0
        %939 = vmatpush1.bf16.xpose.msra.mxu0 0
        %940 = vmatprep.subr.bf16.mxu0 0
        %941 = vmatpush1.bf16.xpose.msra.mxu0 0
        %942 = vmatprep.subr.bf16.mxu0 0
        %943 = vmatpush1.bf16.xpose.msra.mxu0 0
        %944 = vmatprep.mubr.bf16.mxu0 0
        %945 = vmatmul.mubr.bf16.gmra.mrb[0].mxu0 %v907
        %v946 = vpop.f32.mrb[0].mxu0
        %v947 = vadd.f32 0.0, %v946
        %v948 = vpop.f32.mrb[0].mxu0
        %v949 = vpop.f32.mrb[0].mxu0
        %v950 = vpop.f32.mrb[0].mxu0
        %951 = vdwg.mxu0
        %v952 = vmul.f32 %v947, 0.25
        %v953 = vsel %vm728, %v952, -inf
        %954 = vmax.xlane.f32.xlu0 %v953
        %v955 = vpop.xlane.xlu0 %954
        %v956 = vsub.f32 %v952, %v955
        %v957 = vmul.f32 %v956, 1.442695
        %v958 = vpow.pop %v957
        %v959 = vsel %vm728, %v958, 0.0
        %960 = vadd.xlane.f32.xlu0 %v959
        %v961 = vpop.xlane.xlu0 %960
        %v962 = vrcp.pop %v961
        %v963 = vmul.f32 %v958, %v962
        %v964 = vpack.c.bf16 %v963, %v963
        %965 = vrot.lane.b32.xlu0 %v676, 96
        %v966 = vpop.permute.xlu0 %965
        %v968 = vsel %vm728, %v964, 0
        %v971 = vsel %vm744, %v966, 0
        %973 = vmatprep.subr.bf16.mxu0 0
        %974 = vmatpush1.bf16.msra.mxu0 %v971
        %975 = vmatprep.subr.bf16.mxu0 0
        %976 = vmatpush1.bf16.msra.mxu0 0
        %977 = vmatprep.subr.bf16.mxu0 0
        %978 = vmatpush1.bf16.msra.mxu0 0
        %979 = vmatprep.subr.bf16.mxu0 0
        %980 = vmatpush1.bf16.msra.mxu0 0
        %981 = vmatprep.subr.bf16.mxu0 0
        %982 = vmatpush1.bf16.msra.mxu0 0
        %983 = vmatprep.subr.bf16.mxu0 0
        %984 = vmatpush1.bf16.msra.mxu0 0
        %985 = vmatprep.subr.bf16.mxu0 0
        %986 = vmatpush1.bf16.msra.mxu0 0
        %987 = vmatprep.subr.bf16.mxu0 0
        %988 = vmatpush1.bf16.msra.mxu0 0
        %989 = vmatprep.subr.bf16.mxu0 0
        %990 = vmatpush1.bf16.msra.mxu0 0
        %991 = vmatprep.subr.bf16.mxu0 0
        %992 = vmatpush1.bf16.msra.mxu0 0
        %993 = vmatprep.subr.bf16.mxu0 0
        %994 = vmatpush1.bf16.msra.mxu0 0
        %995 = vmatprep.subr.bf16.mxu0 0
        %996 = vmatpush1.bf16.msra.mxu0 0
        %997 = vmatprep.subr.bf16.mxu0 0
        %998 = vmatpush1.bf16.msra.mxu0 0
        %999 = vmatprep.subr.bf16.mxu0 0
        %1000 = vmatpush1.bf16.msra.mxu0 0
        %1001 = vmatprep.subr.bf16.mxu0 0
        %1002 = vmatpush1.bf16.msra.mxu0 0
        %1003 = vmatprep.subr.bf16.mxu0 0
        %1004 = vmatpush1.bf16.msra.mxu0 0
        %1005 = vmatprep.mubr.bf16.mxu0 0
        %1006 = vmatmul.mubr.bf16.gmra.mrb[0].mxu0 %v968
        %v1007 = vpop.f32.mrb[0].mxu0
        %v1008 = vadd.f32 0.0, %v1007
        %v1009 = vpop.f32.mrb[0].mxu0
        %v1010 = vpop.f32.mrb[0].mxu0
        %v1011 = vpop.f32.mrb[0].mxu0
        %1012 = vdwg.mxu0
        %v1013 = vpack.c.bf16 %v1008, %v1008
        %1014 = vrot.lane.b32.xlu0 %v675, 80
        %v1015 = vpop.permute.xlu0 %1014
        %1016 = vrot.lane.b32.xlu0 %v675, 16
        %v1017 = vpop.permute.xlu0 %1016
        %v1019 = vsel %vm680, %v1015, 0
        %v1022 = vsel %vm680, %v1017, 0
        %1024 = vmatprep.subr.bf16.mxu0 0
        %1025 = vmatpush1.bf16.xpose.msra.mxu0 %v1022
        %1026 = vmatprep.subr.bf16.mxu0 0
        %1027 = vmatpush1.bf16.xpose.msra.mxu0 0
        %1028 = vmatprep.subr.bf16.mxu0 0
        %1029 = vmatpush1.bf16.xpose.msra.mxu0 0
        %1030 = vmatprep.subr.bf16.mxu0 0
        %1031 = vmatpush1.bf16.xpose.msra.mxu0 0
        %1032 = vmatprep.subr.bf16.mxu0 0
        %1033 = vmatpush1.bf16.xpose.msra.mxu0 0
        %1034 = vmatprep.subr.bf16.mxu0 0
        %1035 = vmatpush1.bf16.xpose.msra.mxu0 0
        %1036 = vmatprep.subr.bf16.mxu0 0
        %1037 = vmatpush1.bf16.xpose.msra.mxu0 0
        %1038 = vmatprep.subr.bf16.mxu0 0
        %1039 = vmatpush1.bf16.xpose.msra.mxu0 0
        %1040 = vmatprep.subr.bf16.mxu0 0
        %1041 = vmatpush1.bf16.xpose.msra.mxu0 0
        %1042 = vmatprep.subr.bf16.mxu0 0
        %1043 = vmatpush1.bf16.xpose.msra.mxu0 0
        %1044 = vmatprep.subr.bf16.mxu0 0
        %1045 = vmatpush1.bf16.xpose.msra.mxu0 0
        %1046 = vmatprep.subr.bf16.mxu0 0
        %1047 = vmatpush1.bf16.xpose.msra.mxu0 0
        %1048 = vmatprep.subr.bf16.mxu0 0
        %1049 = vmatpush1.bf16.xpose.msra.mxu0 0
        %1050 = vmatprep.subr.bf16.mxu0 0
        %1051 = vmatpush1.bf16.xpose.msra.mxu0 0
        %1052 = vmatprep.subr.bf16.mxu0 0
        %1053 = vmatpush1.bf16.xpose.msra.mxu0 0
        %1054 = vmatprep.subr.bf16.mxu0 0
        %1055 = vmatpush1.bf16.xpose.msra.mxu0 0
        %1056 = vmatprep.mubr.bf16.mxu0 0
        %1057 = vmatmul.mubr.bf16.gmra.mrb[0].mxu0 %v1019
        %v1058 = vpop.f32.mrb[0].mxu0
        %v1059 = vadd.f32 0.0, %v1058
        %v1060 = vpop.f32.mrb[0].mxu0
        %v1061 = vpop.f32.mrb[0].mxu0
        %v1062 = vpop.f32.mrb[0].mxu0
        %1063 = vdwg.mxu0
        %v1064 = vmul.f32 %v1059, 0.25
        %v1065 = vsel %vm728, %v1064, -inf
        %1066 = vmax.xlane.f32.xlu0 %v1065
        %v1067 = vpop.xlane.xlu0 %1066
        %v1068 = vsub.f32 %v1064, %v1067
        %v1069 = vmul.f32 %v1068, 1.442695
        %v1070 = vpow.pop %v1069
        %v1071 = vsel %vm728, %v1070, 0.0
        %1072 = vadd.xlane.f32.xlu0 %v1071
        %v1073 = vpop.xlane.xlu0 %1072
        %v1074 = vrcp.pop %v1073
        %v1075 = vmul.f32 %v1070, %v1074
        %v1076 = vpack.c.bf16 %v1075, %v1075
        %1077 = vrot.lane.b32.xlu0 %v676, 80
        %v1078 = vpop.permute.xlu0 %1077
        %v1080 = vsel %vm728, %v1076, 0
        %v1083 = vsel %vm744, %v1078, 0
        %1085 = vmatprep.subr.bf16.mxu0 0
        %1086 = vmatpush1.bf16.msra.mxu0 %v1083
        %1087 = vmatprep.subr.bf16.mxu0 0
        %1088 = vmatpush1.bf16.msra.mxu0 0
        %1089 = vmatprep.subr.bf16.mxu0 0
        %1090 = vmatpush1.bf16.msra.mxu0 0
        %1091 = vmatprep.subr.bf16.mxu0 0
        %1092 = vmatpush1.bf16.msra.mxu0 0
        %1093 = vmatprep.subr.bf16.mxu0 0
        %1094 = vmatpush1.bf16.msra.mxu0 0
        %1095 = vmatprep.subr.bf16.mxu0 0
        %1096 = vmatpush1.bf16.msra.mxu0 0
        %1097 = vmatprep.subr.bf16.mxu0 0
        %1098 = vmatpush1.bf16.msra.mxu0 0
        %1099 = vmatprep.subr.bf16.mxu0 0
        %1100 = vmatpush1.bf16.msra.mxu0 0
        %1101 = vmatprep.subr.bf16.mxu0 0
        %1102 = vmatpush1.bf16.msra.mxu0 0
        %1103 = vmatprep.subr.bf16.mxu0 0
        %1104 = vmatpush1.bf16.msra.mxu0 0
        %1105 = vmatprep.subr.bf16.mxu0 0
        %1106 = vmatpush1.bf16.msra.mxu0 0
        %1107 = vmatprep.subr.bf16.mxu0 0
        %1108 = vmatpush1.bf16.msra.mxu0 0
        %1109 = vmatprep.subr.bf16.mxu0 0
        %1110 = vmatpush1.bf16.msra.mxu0 0
        %1111 = vmatprep.subr.bf16.mxu0 0
        %1112 = vmatpush1.bf16.msra.mxu0 0
        %1113 = vmatprep.subr.bf16.mxu0 0
        %1114 = vmatpush1.bf16.msra.mxu0 0
        %1115 = vmatprep.subr.bf16.mxu0 0
        %1116 = vmatpush1.bf16.msra.mxu0 0
        %1117 = vmatprep.mubr.bf16.mxu0 0
        %1118 = vmatmul.mubr.bf16.gmra.mrb[0].mxu0 %v1080
        %v1119 = vpop.f32.mrb[0].mxu0
        %v1120 = vadd.f32 0.0, %v1119
        %v1121 = vpop.f32.mrb[0].mxu0
        %v1122 = vpop.f32.mrb[0].mxu0
        %v1123 = vpop.f32.mrb[0].mxu0
        %1124 = vdwg.mxu0
        %v1125 = vpack.c.bf16 %v1120, %v1120
        %1127 = vrot.lane.b32.xlu0 %v901, 16
        %v1128 = vpop.permute.xlu0 %1127
        %1130 = vrot.lane.b32.xlu0 %v1013, 32
        %v1131 = vpop.permute.xlu0 %1130
        %1133 = vrot.lane.b32.xlu0 %v1125, 48
        %v1134 = vpop.permute.xlu0 %1133
        %v1137 = vsel %vm680, %v788, %v1128
        %vm1138 = vcmask 261120
        %v1140 = vsel %vm1138, %v1137, %v1131
        %vm1141 = vcmask 392192
        %v1143 = vsel %vm1141, %v1140, %v1134
        %v1144 = vld [vmem:[%s6] sm:$0xf]
        %v1145 = vld [vmem:[%s6 + $0x4] sm:$0xf]
        %v1146 = vld [vmem:[%s6 + $0x8] sm:$0xf]
        %v1147 = vld [vmem:[%s6 + $0xc] sm:$0xf]
        %v1148 = vld [vmem:[%s6 + $0x10] sm:$0xf]
        %v1149 = vld [vmem:[%s6 + $0x14] sm:$0xf]
        %v1150 = vld [vmem:[%s6 + $0x18] sm:$0xf]
        %v1151 = vld [vmem:[%s6 + $0x1c] sm:$0xf]
        %v1152 = vld [vmem:[%s7] sm:$0x1]
        %v1154 = vlaneseq
        %v1155 = vshrl.u32 %v1154, 7
        %v1156 = vsub.s32 0, %v1155
        %v1157 = vrot.slane %v1152, %v1156
        %v1167 = vunpack.c.l.b16 %v1144
        %v1168 = vunpack.c.l.b16 %v1145
        %v1169 = vunpack.c.l.b16 %v1146
        %v1170 = vunpack.c.l.b16 %v1147
        %v1171 = vunpack.c.l.b16 %v1148
        %v1172 = vunpack.c.l.b16 %v1149
        %v1173 = vunpack.c.l.b16 %v1150
        %v1174 = vunpack.c.l.b16 %v1151
        %v1175 = vpack.c.b16 %v1168, %v1167
        %v1176 = vpack.c.b16 %v1170, %v1169
        %v1177 = vpack.c.b16 %v1172, %v1171
        %v1178 = vpack.c.b16 %v1174, %v1173
        %v1183 = vsel %vm541, %v1143, 0
        %1185 = vmatprep.subr.bf16.mxu0 0
        %1186 = vmatpush1.bf16.msra.mxu0 %v1175
        %1187 = vmatprep.subr.bf16.mxu0 0
        %1188 = vmatpush1.bf16.msra.mxu0 %v1176
        %1189 = vmatprep.subr.bf16.mxu0 0
        %1190 = vmatpush1.bf16.msra.mxu0 %v1177
        %1191 = vmatprep.subr.bf16.mxu0 0
        %1192 = vmatpush1.bf16.msra.mxu0 %v1178
        %1193 = vmatprep.subr.bf16.mxu0 0
        %1194 = vmatpush1.bf16.msra.mxu0 0
        %1195 = vmatprep.subr.bf16.mxu0 0
        %1196 = vmatpush1.bf16.msra.mxu0 0
        %1197 = vmatprep.subr.bf16.mxu0 0
        %1198 = vmatpush1.bf16.msra.mxu0 0
        %1199 = vmatprep.subr.bf16.mxu0 0
        %1200 = vmatpush1.bf16.msra.mxu0 0
        %1201 = vmatprep.subr.bf16.mxu0 0
        %1202 = vmatpush1.bf16.msra.mxu0 0
        %1203 = vmatprep.subr.bf16.mxu0 0
        %1204 = vmatpush1.bf16.msra.mxu0 0
        %1205 = vmatprep.subr.bf16.mxu0 0
        %1206 = vmatpush1.bf16.msra.mxu0 0
        %1207 = vmatprep.subr.bf16.mxu0 0
        %1208 = vmatpush1.bf16.msra.mxu0 0
        %1209 = vmatprep.subr.bf16.mxu0 0
        %1210 = vmatpush1.bf16.msra.mxu0 0
        %1211 = vmatprep.subr.bf16.mxu0 0
        %1212 = vmatpush1.bf16.msra.mxu0 0
        %1213 = vmatprep.subr.bf16.mxu0 0
        %1214 = vmatpush1.bf16.msra.mxu0 0
        %1215 = vmatprep.subr.bf16.mxu0 0
        %1216 = vmatpush1.bf16.msra.mxu0 0
        %1217 = vmatprep.mubr.bf16.mxu0 0
        %1218 = vmatmul.mubr.bf16.gmra.mrb[0].mxu0 %v1183
        %v1219 = vpop.f32.mrb[0].mxu0
        %v1220 = vadd.f32 %v1157, %v1219
        %v1221 = vpop.f32.mrb[0].mxu0
        %v1222 = vpop.f32.mrb[0].mxu0
        %v1223 = vpop.f32.mrb[0].mxu0
        %1224 = vdwg.mxu0
        %v1225 = vadd.f32 %v538, %v1220
        %v1226 = vld [vmem:[#allocation5] sm:$0x1]
        %v1227 = vld [vmem:[#allocation7] sm:$0x1]
        %v1228 = vsel %vm541, %v1225, 0.0
        %1229 = vadd.xlane.f32.xlu0 %v1228
        %v1230 = vpop.xlane.xlu0 %1229
        %v1231 = vmul.f32 %v1230, %v545
        %v1232 = vsub.f32 %v1225, %v1231
        %v1233 = vmul.f32 %v1232, %v1232
        %v1234 = vsel %vm541, %v1233, 0.0
        %1235 = vadd.xlane.f32.xlu0 %v1234
        %v1236 = vpop.xlane.xlu0 %1235
        %v1237 = vmul.f32 %v1236, %v545
        %v1238 = vadd.f32 %v1237, 1e-06
        %v1239 = vrsqrt.pop %v1238
        %v1240 = vmul.f32 %v1232, %v1239
        %v1242 = vlaneseq
        %v1243 = vshrl.u32 %v1242, 7
        %v1244 = vsub.s32 0, %v1243
        %v1245 = vrot.slane %v1226, %v1244
        %v1247 = vmul.f32 %v1240, %v1245
        %v1249 = vlaneseq
        %v1250 = vshrl.u32 %v1249, 7
        %v1251 = vsub.s32 0, %v1250
        %v1252 = vrot.slane %v1227, %v1251
        %v1254 = vadd.f32 %v1247, %v1252
        %v1255 = vpack.c.bf16 %v1254, %v1254
        %v1256 = vld [vmem:[#allocation8] sm:$0xf]
        %v1257 = vld [vmem:[#allocation8 + $0x4] sm:$0xf]
        %v1258 = vld [vmem:[#allocation8 + $0x8] sm:$0xf]
        %v1259 = vld [vmem:[#allocation8 + $0xc] sm:$0xf]
        %v1260 = vld [vmem:[#allocation8 + $0x10] sm:$0xf]
        %v1261 = vld [vmem:[#allocation8 + $0x14] sm:$0xf]
        %v1262 = vld [vmem:[#allocation8 + $0x18] sm:$0xf]
        %v1263 = vld [vmem:[#allocation8 + $0x1c] sm:$0xf]
        %v1264 = vld [vmem:[#allocation10] sm:$0x1]
        %v1266 = vlaneseq
        %v1267 = vshrl.u32 %v1266, 7
        %v1268 = vsub.s32 0, %v1267
        %v1269 = vrot.slane %v1264, %v1268
        %v1279 = vunpack.c.l.b16 %v1256
        %v1280 = vunpack.c.l.b16 %v1257
        %v1281 = vunpack.c.l.b16 %v1258
        %v1282 = vunpack.c.l.b16 %v1259
        %v1283 = vunpack.c.l.b16 %v1260
        %v1284 = vunpack.c.l.b16 %v1261
        %v1285 = vunpack.c.l.b16 %v1262
        %v1286 = vunpack.c.l.b16 %v1263
        %v1287 = vpack.c.b16 %v1280, %v1279
        %v1288 = vpack.c.b16 %v1282, %v1281
        %v1289 = vpack.c.b16 %v1284, %v1283
        %v1290 = vpack.c.b16 %v1286, %v1285
        %v1296 = vsel %vm541, %v1255, 0
        %1298 = vmatprep.subr.bf16.mxu0 0
        %1299 = vmatpush1.bf16.msra.mxu0 %v1287
        %1300 = vmatprep.subr.bf16.mxu0 0
        %1301 = vmatpush1.bf16.msra.mxu0 %v1288
        %1302 = vmatprep.subr.bf16.mxu0 0
        %1303 = vmatpush1.bf16.msra.mxu0 %v1289
        %1304 = vmatprep.subr.bf16.mxu0 0
        %1305 = vmatpush1.bf16.msra.mxu0 %v1290
        %1306 = vmatprep.subr.bf16.mxu0 0
        %1307 = vmatpush1.bf16.msra.mxu0 0
        %1308 = vmatprep.subr.bf16.mxu0 0
        %1309 = vmatpush1.bf16.msra.mxu0 0
        %1310 = vmatprep.subr.bf16.mxu0 0
        %1311 = vmatpush1.bf16.msra.mxu0 0
        %1312 = vmatprep.subr.bf16.mxu0 0
        %1313 = vmatpush1.bf16.msra.mxu0 0
        %1314 = vmatprep.subr.bf16.mxu0 0
        %1315 = vmatpush1.bf16.msra.mxu0 0
        %1316 = vmatprep.subr.bf16.mxu0 0
        %1317 = vmatpush1.bf16.msra.mxu0 0
        %1318 = vmatprep.subr.bf16.mxu0 0
        %1319 = vmatpush1.bf16.msra.mxu0 0
        %1320 = vmatprep.subr.bf16.mxu0 0
        %1321 = vmatpush1.bf16.msra.mxu0 0
        %1322 = vmatprep.subr.bf16.mxu0 0
        %1323 = vmatpush1.bf16.msra.mxu0 0
        %1324 = vmatprep.subr.bf16.mxu0 0
        %1325 = vmatpush1.bf16.msra.mxu0 0
        %1326 = vmatprep.subr.bf16.mxu0 0
        %1327 = vmatpush1.bf16.msra.mxu0 0
        %1328 = vmatprep.subr.bf16.mxu0 0
        %1329 = vmatpush1.bf16.msra.mxu0 0
        %1330 = vmatprep.mubr.bf16.mxu0 0
        %1331 = vmatmul.mubr.bf16.gmra.mrb[0].mxu0 %v1296
        %v1332 = vpop.f32.mrb[0].mxu0
        %v1333 = vadd.f32 %v1269, %v1332
        %v1334 = vpop.f32.mrb[0].mxu0
        %v1335 = vpop.f32.mrb[0].mxu0
        %v1336 = vpop.f32.mrb[0].mxu0
        %1337 = vdwg.mxu0
        %v1338 = vmul.f32 %v1333, 0.5
        %v1339 = vmul.f32 %v1333, 0.044715
        %v1340 = vmul.f32 %v1339, %v1333
        %v1341 = vmul.f32 %v1340, %v1333
        %v1342 = vadd.f32 %v1333, %v1341
        %v1343 = vmul.f32 %v1342, 0.7978846
        %v1344 = vtanh.pop %v1343
        %v1345 = vadd.f32 %v1344, 1.0
        %v1346 = vmul.f32 %v1338, %v1345
        %v1347 = vpack.c.bf16 %v1346, %v1346
        %v1348 = vld [vmem:[%s12] sm:$0xf]
        %v1349 = vld [vmem:[%s12 + $0x4] sm:$0xf]
        %v1350 = vld [vmem:[%s12 + $0x8] sm:$0xf]
        %v1351 = vld [vmem:[%s12 + $0xc] sm:$0xf]
        %v1352 = vld [vmem:[%s12 + $0x10] sm:$0xf]
        %v1353 = vld [vmem:[%s12 + $0x14] sm:$0xf]
        %v1354 = vld [vmem:[%s12 + $0x18] sm:$0xf]
        %v1355 = vld [vmem:[%s12 + $0x1c] sm:$0xf]
        %v1356 = vld [vmem:[%s12 + $0x20] sm:$0xf]
        %v1357 = vld [vmem:[%s12 + $0x24] sm:$0xf]
        %v1358 = vld [vmem:[%s12 + $0x28] sm:$0xf]
        %v1359 = vld [vmem:[%s12 + $0x2c] sm:$0xf]
        %v1360 = vld [vmem:[%s12 + $0x30] sm:$0xf]
        %v1361 = vld [vmem:[%s12 + $0x34] sm:$0xf]
        %v1362 = vld [vmem:[%s12 + $0x38] sm:$0xf]
        %v1363 = vld [vmem:[%s12 + $0x3c] sm:$0xf]
        %v1380 = vunpack.c.l.b16 %v1348
        %v1381 = vunpack.c.l.b16 %v1349
        %v1382 = vunpack.c.l.b16 %v1350
        %v1383 = vunpack.c.l.b16 %v1351
        %v1384 = vunpack.c.l.b16 %v1352
        %v1385 = vunpack.c.l.b16 %v1353
        %v1386 = vunpack.c.l.b16 %v1354
        %v1387 = vunpack.c.l.b16 %v1355
        %v1388 = vunpack.c.l.b16 %v1356
        %v1389 = vunpack.c.l.b16 %v1357
        %v1390 = vunpack.c.l.b16 %v1358
        %v1391 = vunpack.c.l.b16 %v1359
        %v1392 = vunpack.c.l.b16 %v1360
        %v1393 = vunpack.c.l.b16 %v1361
        %v1394 = vunpack.c.l.b16 %v1362
        %v1395 = vunpack.c.l.b16 %v1363
        %v1396 = vpack.c.b16 %v1381, %v1380
        %v1397 = vpack.c.b16 %v1383, %v1382
        %v1398 = vpack.c.b16 %v1385, %v1384
        %v1399 = vpack.c.b16 %v1387, %v1386
        %v1400 = vpack.c.b16 %v1389, %v1388
        %v1401 = vpack.c.b16 %v1391, %v1390
        %v1402 = vpack.c.b16 %v1393, %v1392
        %v1403 = vpack.c.b16 %v1395, %v1394
        %1412 = vmatprep.subr.bf16.mxu0 0
        %1413 = vmatpush1.bf16.msra.mxu0 %v1396
        %1414 = vmatprep.subr.bf16.mxu0 0
        %1415 = vmatpush1.bf16.msra.mxu0 %v1397
        %1416 = vmatprep.subr.bf16.mxu0 0
        %1417 = vmatpush1.bf16.msra.mxu0 %v1398
        %1418 = vmatprep.subr.bf16.mxu0 0
        %1419 = vmatpush1.bf16.msra.mxu0 %v1399
        %1420 = vmatprep.subr.bf16.mxu0 0
        %1421 = vmatpush1.bf16.msra.mxu0 %v1400
        %1422 = vmatprep.subr.bf16.mxu0 0
        %1423 = vmatpush1.bf16.msra.mxu0 %v1401
        %1424 = vmatprep.subr.bf16.mxu0 0
        %1425 = vmatpush1.bf16.msra.mxu0 %v1402
        %1426 = vmatprep.subr.bf16.mxu0 0
        %1427 = vmatpush1.bf16.msra.mxu0 %v1403
        %1428 = vmatprep.subr.bf16.mxu0 0
        %1429 = vmatpush1.bf16.msra.mxu0 0
        %1430 = vmatprep.subr.bf16.mxu0 0
        %1431 = vmatpush1.bf16.msra.mxu0 0
        %1432 = vmatprep.subr.bf16.mxu0 0
        %1433 = vmatpush1.bf16.msra.mxu0 0
        %1434 = vmatprep.subr.bf16.mxu0 0
        %1435 = vmatpush1.bf16.msra.mxu0 0
        %1436 = vmatprep.subr.bf16.mxu0 0
        %1437 = vmatpush1.bf16.msra.mxu0 0
        %1438 = vmatprep.subr.bf16.mxu0 0
        %1439 = vmatpush1.bf16.msra.mxu0 0
        %1440 = vmatprep.subr.bf16.mxu0 0
        %1441 = vmatpush1.bf16.msra.mxu0 0
        %1442 = vmatprep.subr.bf16.mxu0 0
        %1443 = vmatpush1.bf16.msra.mxu0 0
        %1444 = vmatprep.mubr.bf16.mxu0 0
        %1445 = vmatmul.mubr.bf16.gmra.mrb[0].mxu0 %v1347
        %v1446 = vpop.f32.mrb[0].mxu0
        %v1447 = vadd.f32 0.0, %v1446
        %v1448 = vpop.f32.mrb[0].mxu0
        %v1449 = vpop.f32.mrb[0].mxu0
        %v1450 = vpop.f32.mrb[0].mxu0
        %1451 = vdwg.mxu0
        %v1452 = vadd.f32 %v1225, %v1447
        %v1453 = vld [vmem:[%s13] sm:$0x1]
        %v1455 = vlaneseq
        %v1456 = vshrl.u32 %v1455, 7
        %v1457 = vsub.s32 0, %v1456
        %v1458 = vrot.slane %v1453, %v1457
        %v1460 = vadd.f32 %v1452, %v1458
        %1461 = vst.msk [vmem:[%s534] sm:$0xff] %vm541, %v1460
        %s1462 = sand.u32 %s340, 1
        %s1463 = scalar_lea.sflag [#allocation4], %s1462
        %s1464 = sand.u32 %s340, 1
        %s1465 = smul.addr %s1464, 8
        %s1466 = scalar_lea.vmem [#allocation11], %s1465
        // Predicated region
        $region97: #{tpu_custom_call.1} parent=75 // pred_check
          %p1467 = pneg %p350
        $region98: #{tpu_custom_call.1} parent=75 // pred_check_branch
          %1469 = sbr.rel (%p1467) target = $region100
        $region99: #{tpu_custom_call.1} parent=75 // pred_region
          %s1471 = ssub.s32 128, 128
          %1472 = vsyncadd %s1463, %s1471
          %s1473 = smul.addr %s33, 128
          %s1474 = scalar_lea.hbm %s14, %s1473
          %s1476 = sshll.u32 %s1466, 4
          %s1477 = int_to_ptr.vmem [resolvable:$true] %s1476
          %1479 = dma.vmem_to_hbm [thread:$0]  %s1477, 128, %s1474, %s1463
        $region100: #{tpu_custom_call.1} parent=75 // pred_fallthru
          _
      $region76: #{tpu_custom_call.1} parent=5 // pred_fallthru
        _
      %p1480 = scmp.le.s32.totalorder 2, %s28
      // Predicated region
      $region101: #{tpu_custom_call.1} parent=5 // pred_check
        %p1481 = pneg %p1480
      $region102: #{tpu_custom_call.1} parent=5 // pred_check_branch
        %1483 = sbr.rel (%p1481) target = $region104
      $region103: #{tpu_custom_call.1} parent=5 // pred_region
        %s1484 = ssub.s32 %s28, 2
        // Predicated region
        $region105: #{tpu_custom_call.1} parent=103 // pred_check
          %p1485 = pneg %p356
        $region106: #{tpu_custom_call.1} parent=103 // pred_check_branch
          %1487 = sbr.rel (%p1485) target = $region108
        $region107: #{tpu_custom_call.1} parent=103 // pred_region
          %s1488 = sand.u32 %s341, 1
          %s1489 = scalar_lea.sflag [#allocation4], %s1488
          %s1490 = sand.u32 %s341, 1
          %s1491 = smul.addr %s1490, 8
          %s1492 = scalar_lea.vmem [#allocation11], %s1491
          %1493 = dma.done %s1489, 128
        $region108: #{tpu_custom_call.1} parent=103 // pred_fallthru
          _
      $region104: #{tpu_custom_call.1} parent=5 // pred_fallthru
        _
    $region6: #{tpu_custom_call.1} parent=1 // loop_footer
      %s32 = sadd.s32 1, %s28
    $region7: #{tpu_custom_call.1} parent=1 // loop_footer_branch
      %27 = sbr.rel target = $region3
    $region8: #{tpu_custom_call.1} parent=1 // loop_exit
      _
    %1494 = vsyncpa [#allocation3], 1
    %s1495 = scalar_lea.sflag [#allocation3], 1
    %1496 = vsyncpa %s1495, 1
    %1497 = vsyncpa [#allocation6], 1
    %1498 = vsyncpa [#allocation9], 1
    %1499 = vsyncpa [#allocation4], 1
    %s1500 = scalar_lea.sflag [#allocation4], 1
    %1501 = vsyncpa %s1500, 1

</llo_original>
